<compile_context>
chip_gen: v7x
topology: tpu7x:2x2x1
jax: 0.10.0
libtpu: 0.0.40
codegen_flags: <defaults>
</compile_context>

<pallas_src>
from functools import partial

import jax
import jax.numpy as jnp
from jax.experimental import pallas as pl
from jax.experimental.pallas import tpu as pltpu


def _attention_kernel(x_ref, wqkv_ref, wproj_ref, bproj_ref, o_ref, ctx_ref, *,
                      num_heads, head_dim, bt, n_tok):
    # x_ref:     (Bt, N, C)  batch tile (bf16)
    # wqkv_ref:  (C, 3C)     qkv weight, pre-transposed, q cols pre-scaled, bf16
    # wproj_ref: (C, C)      proj weight, pre-transposed, bf16
    # bproj_ref: (1, C)      proj bias, f32
    # o_ref:     (Bt, N, C)  output
    # ctx_ref:   (Bt*N, C)   bf16 VMEM scratch holding the per-head contexts
    C = num_heads * head_dim
    M = bt * n_tok

    # Flatten the batch tile: (Bt, N, C) -> (Bt*N, C).  For bt == 1 this is a
    # squeeze; for bt > 1 with N % 8 != 0 it is a (correct) relayout copy.
    x = x_ref[...].reshape(M, C)
    lp = x.dtype                                   # low-precision matmul dtype

    # Fused QKV projection on the MXU: (M, C) @ (C, 3C).  f32 accumulation, but
    # the result is cast straight to bf16 so no f32 (M, 3C) copy stays live.
    qkv = jnp.dot(x, wqkv_ref[...],
                  preferred_element_type=jnp.float32).astype(lp)

    # Per-head attention, batched over the Bt sequences in the tile.  Column
    # layout of qkv is [q(H*hd), k(H*hd), v(H*hd)], heads contiguous — identical
    # to the PyTorch reshape(B, N, 3, H, hd) split.
    for h in range(num_heads):
        lo = h * head_dim
        hi = lo + head_dim
        q = qkv[:, 0 * C + lo:0 * C + hi].reshape(bt, n_tok, head_dim)
        k = qkv[:, 1 * C + lo:1 * C + hi].reshape(bt, n_tok, head_dim)
        v = qkv[:, 2 * C + lo:2 * C + hi].reshape(bt, n_tok, head_dim)

        # Logits (softmax scale already folded into the q weight columns).
        s = jnp.einsum('bnd,bmd->bnm', q, k,
                       preferred_element_type=jnp.float32)

        # Numerically stable softmax in f32. attn_drop_ratio = 0 -> identity.
        s = s - jnp.max(s, axis=-1, keepdims=True)
        p = jnp.exp(s)
        p = p * pl.reciprocal(jnp.sum(p, axis=-1, keepdims=True), approx=True)

        # Context: (Bt, N, N) @ (Bt, N, hd) -> (Bt, N, hd), f32 acc.
        ctx = jnp.einsum('bnm,bmd->bnd', p.astype(lp), v,
                         preferred_element_type=jnp.float32)

        # Lane-slab write: head h's context lands in columns [lo:hi] of the
        # bf16 context buffer.  This is the concat over heads (== the PyTorch
        # transpose(1,2).reshape(B,N,C)) with no relayout of the full tensor,
        # and it bounds the per-head s/p/ctx live ranges.
        ctx_ref[:, lo:hi] = ctx.reshape(M, head_dim).astype(lp)

    # Single full-width output projection: (M, C) @ (C, C), f32 acc on the MXU.
    out = jnp.dot(ctx_ref[...], wproj_ref[...],
                  preferred_element_type=jnp.float32)
    out = out + bproj_ref[...].astype(jnp.float32)   # proj bias; proj_drop = 0
    o_ref[...] = out.reshape(bt, n_tok, C).astype(o_ref.dtype)


def _vmem_capacity_bytes():
    """Physical VMEM of the local TPU (128 MiB on v5e/v6e, 64 MiB per TC on
    v7x).  Falls back to the conservative 64 MiB if the query is unavailable."""
    try:
        return int(pltpu.get_tpu_info().vmem_capacity_bytes)
    except Exception:
        return 64 << 20


def _estimate_vmem_bytes(bt, N, C, num_heads):
    """Rough per-grid-step VMEM footprint (single-buffered weights,
    double-buffered I/O blocks, qkv / per-head softmax / context / projection
    intermediates, plus slack for compiler temporaries)."""
    head_dim = C // num_heads
    M = bt * N
    lp, f32 = 2, 4
    weights = (3 * C * C + C * C) * lp + C * f32          # resident, 1-buffered
    io = 2 * 2 * (M * C) * lp                              # x + out, 2-buffered
    qkv = M * 3 * C * lp
    ctx_buf = M * C * lp                                   # context scratch
    head_work = 2 * (2 * bt * N * N * f32 + M * head_dim * (f32 + lp))
    proj = M * C * f32
    return weights + io + qkv + ctx_buf + head_work + proj + (4 << 20)


def _pick_batch_tile(B, N, C, num_heads, vmem_budget):
    """Largest divisor of B such that the VMEM estimate fits, rows per step
    stay <= ~1024 (512-1024 target), and >= 2 grid steps remain when B >= 2
    (keeps both v7x TensorCores busy).  Prefers 128-aligned row counts for the
    v5e 128-wide MXU when that doesn't shrink the tile too much."""
    max_rows = 1024
    candidates = []
    for bt in range(1, B + 1):
        if B % bt:
            continue
        if B >= 2 and B // bt < 2:
            continue
        if bt > 1 and bt * N > max_rows:
            continue
        if bt > 1 and _estimate_vmem_bytes(bt, N, C, num_heads) > vmem_budget:
            continue
        candidates.append(bt)
    if not candidates:
        return 1
    best = max(candidates)
    aligned = [d for d in candidates if (d * N) % 128 == 0]
    if aligned and max(aligned) * 2 >= best:
        return max(aligned)
    return best


def attention_forward(x, w_qkv, w_proj, b_proj, *, num_heads,
                      compute_dtype=jnp.bfloat16, out_dtype=None):
    """x: (B, N, C); w_qkv: (3C, C) [torch layout]; w_proj: (C, C); b_proj: (C,)."""
    B, N, C = x.shape
    head_dim = C // num_heads
    scale = head_dim ** (-0.5)
    out_dtype = x.dtype if out_dtype is None else out_dtype

    # Generation-aware VMEM budget (no blanket 64 MiB cap on v5e/v6e).
    capacity = _vmem_capacity_bytes()
    budget = int(capacity * 0.85)
    bt = _pick_batch_tile(B, N, C, num_heads, budget)
    grid = (B // bt,)
    vmem_limit = int(min(max(_estimate_vmem_bytes(bt, N, C, num_heads),
                             32 << 20), budget))

    # Glue: pre-transpose weights (nn.Linear computes x @ W.T + b), fold the
    # softmax scale into the Q output columns (exact: (x@(Wq*s))@k^T = s*q@k^T),
    # cast MXU operands to bf16; accumulation stays f32 inside the kernel.
    w_qkv_t = jnp.transpose(w_qkv).astype(jnp.float32)         # (C, 3C)
    w_qkv_t = w_qkv_t.at[:, :C].multiply(scale)
    w_qkv_t = w_qkv_t.astype(compute_dtype)
    w_proj_t = jnp.transpose(w_proj).astype(compute_dtype)     # (C, C)
    b_proj_2d = b_proj.reshape(1, C).astype(jnp.float32)       # (1, C)
    x_lp = x.astype(compute_dtype)

    kernel = partial(_attention_kernel, num_heads=num_heads, head_dim=head_dim,
                     bt=bt, n_tok=N)

    def _call(single_buffer_weights):
        w_kwargs = dict(pipeline_mode=pl.Buffered(1)) if single_buffer_weights else {}
        in_specs = [
            pl.BlockSpec((bt, N, C), lambda b: (b, 0, 0)),
            pl.BlockSpec((C, 3 * C), lambda b: (0, 0), **w_kwargs),
            pl.BlockSpec((C, C), lambda b: (0, 0), **w_kwargs),
            pl.BlockSpec((1, C), lambda b: (0, 0), **w_kwargs),
        ]
        return pl.pallas_call(
            kernel,
            out_shape=jax.ShapeDtypeStruct((B, N, C), out_dtype),
            grid_spec=pltpu.PrefetchScalarGridSpec(
                num_scalar_prefetch=0,
                grid=grid,
                in_specs=in_specs,
                out_specs=pl.BlockSpec((bt, N, C), lambda b: (b, 0, 0)),
                scratch_shapes=[pltpu.VMEM((bt * N, C), compute_dtype)],
            ),
            compiler_params=pltpu.CompilerParams(
                dimension_semantics=("parallel",),
                vmem_limit_bytes=vmem_limit),
        )(x_lp, w_qkv_t, w_proj_t, b_proj_2d)

    try:
        # Grid-invariant weights single-buffered (saves ~(3C^2+C^2)*2 bytes).
        return _call(True)
    except Exception:
        # pipeline_mode=pl.Buffered(1) not supported on this jax build — fall
        # back to default double-buffered weight specs (correctness identical).
        return _call(False)


def attention_reference(x, w_qkv, w_proj, b_proj, *, num_heads):
    """Pure-JAX f32 reference mirroring the PyTorch forward exactly."""
    B, N, C = x.shape
    head_dim = C // num_heads
    scale = head_dim ** (-0.5)
    qkv = x @ w_qkv.T                                      # (B, N, 3C)
    qkv = qkv.reshape(B, N, 3, num_heads, head_dim).transpose(2, 0, 3, 1, 4)
    q, k, v = qkv[0], qkv[1], qkv[2]                       # (B, H, N, hd)
    attn = (q @ jnp.swapaxes(k, -2, -1)) * scale           # (B, H, N, N)
    attn = jax.nn.softmax(attn, axis=-1)
    out = (attn @ v).transpose(0, 2, 1, 3).reshape(B, N, C)
    return out @ w_proj.T + b_proj


if __name__ == "__main__":
    # Small ViT-like shapes: B=2, N=16 tokens, C=32 embed dim, 4 heads.
    B, N, C, num_heads = 2, 16, 32, 4

    key = jax.random.PRNGKey(0)
    kx, kq, kp, kb = jax.random.split(key, 4)
    x = jax.random.normal(kx, (B, N, C), dtype=jnp.float32)
    w_qkv = jax.random.normal(kq, (3 * C, C), dtype=jnp.float32) * 0.1   # torch (out, in)
    w_proj = jax.random.normal(kp, (C, C), dtype=jnp.float32) * 0.1
    b_proj = jax.random.normal(kb, (C,), dtype=jnp.float32) * 0.1

    out = attention_forward(x, w_qkv, w_proj, b_proj, num_heads=num_heads)
    out = jax.block_until_ready(out)

    ref = attention_reference(x, w_qkv, w_proj, b_proj, num_heads=num_heads)
    assert out.shape == (B, N, C)
    # bf16 MXU inputs (f32 accumulation / softmax) -> looser tolerance vs f32 ref.
    assert jnp.allclose(out, ref, atol=2e-2, rtol=2e-2), "mismatch vs reference"

    print("KERNEL_OK")
</pallas_src>

<mosaic_0001>
module attributes {stable_mosaic.version = 11 : i64} {
  func.func @_attention_kernel(%arg0: i32, %arg1: memref<1x16x32xbf16, #tpu.memory_space<vmem>>, %arg2: memref<32x96xbf16, #tpu.memory_space<vmem>>, %arg3: memref<32x32xbf16, #tpu.memory_space<vmem>>, %arg4: memref<1x32xf32, #tpu.memory_space<vmem>>, %arg5: memref<1x16x32xf32, #tpu.memory_space<vmem>>, %arg6: memref<16x32xbf16, #tpu.memory_space<vmem>>) attributes {dimension_semantics = [#tpu.dimension_semantics<parallel>], iteration_bounds = array<i64: 2>, scalar_prefetch = 0 : i64, scratch_operands = 1 : i64, tpu.core_type = #tpu.core_type<tc>, window_params = [{transform_indices = @transform_0, window_bounds = array<i64: 1, 16, 32>}, {pipeline_mode = #tpu.pipeline_mode<synchronous>, transform_indices = @transform_1, window_bounds = array<i64: 32, 96>}, {pipeline_mode = #tpu.pipeline_mode<synchronous>, transform_indices = @transform_2, window_bounds = array<i64: 32, 32>}, {pipeline_mode = #tpu.pipeline_mode<synchronous>, transform_indices = @transform_3, window_bounds = array<i64: 1, 32>}, {transform_indices = @transform_4, window_bounds = array<i64: 1, 16, 32>}]} {
    %c0 = arith.constant 0 : index
    %c0_0 = arith.constant 0 : index
    %c0_1 = arith.constant 0 : index
    %0 = vector.load %arg1[%c0, %c0_0, %c0_1] : memref<1x16x32xbf16, #tpu.memory_space<vmem>>, vector<1x16x32xbf16>
    %1 = vector.shape_cast %0 : vector<1x16x32xbf16> to vector<16x32xbf16>
    %c0_2 = arith.constant 0 : index
    %c0_3 = arith.constant 0 : index
    %2 = vector.load %arg2[%c0_2, %c0_3] : memref<32x96xbf16, #tpu.memory_space<vmem>>, vector<32x96xbf16>
    %cst = arith.constant dense<0.000000e+00> : vector<16x96xf32>
    %3 = tpu.matmul %1, %2, %cst {dimension_numbers = #tpu.dot_dimension_numbers<[1], [0], [0], [1], [0, 0, 1, 1], [], []>} : vector<16x32xbf16>, vector<32x96xbf16>, vector<16x96xf32> -> vector<16x96xf32>
    %4 = arith.truncf %3 : vector<16x96xf32> to vector<16x96xbf16>
    %5 = vector.extract_strided_slice %4 {offsets = [0, 0], sizes = [16, 8], strides = [1, 1]} : vector<16x96xbf16> to vector<16x8xbf16>
    %6 = vector.shape_cast %5 : vector<16x8xbf16> to vector<1x16x8xbf16>
    %7 = vector.extract_strided_slice %4 {offsets = [0, 32], sizes = [16, 8], strides = [1, 1]} : vector<16x96xbf16> to vector<16x8xbf16>
    %8 = vector.shape_cast %7 : vector<16x8xbf16> to vector<1x16x8xbf16>
    %9 = vector.extract_strided_slice %4 {offsets = [0, 64], sizes = [16, 8], strides = [1, 1]} : vector<16x96xbf16> to vector<16x8xbf16>
    %10 = vector.shape_cast %9 : vector<16x8xbf16> to vector<1x16x8xbf16>
    "tpu.trace_start"() <{level = 10 : i32, message = "bnd,bmd->bnm"}> : () -> ()
    %cst_4 = arith.constant dense<0.000000e+00> : vector<1x16x16xf32>
    %11 = tpu.matmul %6, %8, %cst_4 {dimension_numbers = #tpu.dot_dimension_numbers<[2], [2], [1], [1], [0, 0, 0, 1, 1, 1], [0], [0]>} : vector<1x16x8xbf16>, vector<1x16x8xbf16>, vector<1x16x16xf32> -> vector<1x16x16xf32>
    "tpu.trace_stop"() : () -> ()
    %cst_5 = arith.constant dense<0xFF800000> : vector<1x16xf32>
    %12 = vector.multi_reduction <maximumf>, %11, %cst_5 [2] : vector<1x16x16xf32> to vector<1x16xf32>
    %13 = vector.shape_cast %12 : vector<1x16xf32> to vector<1x16x1xf32>
    %14 = vector.broadcast %13 : vector<1x16x1xf32> to vector<1x16x16xf32>
    %15 = arith.subf %11, %14 : vector<1x16x16xf32>
    %16 = math.exp %15 : vector<1x16x16xf32>
    %cst_6 = arith.constant dense<0.000000e+00> : vector<1x16xf32>
    %17 = vector.multi_reduction <add>, %16, %cst_6 [2] : vector<1x16x16xf32> to vector<1x16xf32>
    %18 = vector.shape_cast %17 : vector<1x16xf32> to vector<1x16x1xf32>
    %19 = tpu.reciprocal %18 {approx = true} : vector<1x16x1xf32> -> vector<1x16x1xf32>
    %20 = vector.broadcast %19 : vector<1x16x1xf32> to vector<1x16x16xf32>
    %21 = arith.mulf %16, %20 : vector<1x16x16xf32>
    %22 = arith.truncf %21 : vector<1x16x16xf32> to vector<1x16x16xbf16>
    "tpu.trace_start"() <{level = 10 : i32, message = "bnm,bmd->bnd"}> : () -> ()
    %cst_7 = arith.constant dense<0.000000e+00> : vector<1x16x8xf32>
    %23 = tpu.matmul %22, %10, %cst_7 {dimension_numbers = #tpu.dot_dimension_numbers<[2], [1], [1], [2], [0, 0, 0, 1, 1, 2], [0], [0]>} : vector<1x16x16xbf16>, vector<1x16x8xbf16>, vector<1x16x8xf32> -> vector<1x16x8xf32>
    "tpu.trace_stop"() : () -> ()
    %24 = vector.shape_cast %23 : vector<1x16x8xf32> to vector<16x8xf32>
    %25 = arith.truncf %24 : vector<16x8xf32> to vector<16x8xbf16>
    %c0_8 = arith.constant 0 : index
    %c0_9 = arith.constant 0 : index
    %26 = vector.load %arg6[%c0_8, %c0_9] : memref<16x32xbf16, #tpu.memory_space<vmem>>, vector<16x8xbf16>
    tpu.vector_store %arg6[%c0_8, %c0_9], %25 {strides = array<i32>} : memref<16x32xbf16, #tpu.memory_space<vmem>>, vector<16x8xbf16>,
    %27 = vector.extract_strided_slice %4 {offsets = [0, 8], sizes = [16, 8], strides = [1, 1]} : vector<16x96xbf16> to vector<16x8xbf16>
    %28 = vector.shape_cast %27 : vector<16x8xbf16> to vector<1x16x8xbf16>
    %29 = vector.extract_strided_slice %4 {offsets = [0, 40], sizes = [16, 8], strides = [1, 1]} : vector<16x96xbf16> to vector<16x8xbf16>
    %30 = vector.shape_cast %29 : vector<16x8xbf16> to vector<1x16x8xbf16>
    %31 = vector.extract_strided_slice %4 {offsets = [0, 72], sizes = [16, 8], strides = [1, 1]} : vector<16x96xbf16> to vector<16x8xbf16>
    %32 = vector.shape_cast %31 : vector<16x8xbf16> to vector<1x16x8xbf16>
    "tpu.trace_start"() <{level = 10 : i32, message = "bnd,bmd->bnm"}> : () -> ()
    %cst_10 = arith.constant dense<0.000000e+00> : vector<1x16x16xf32>
    %33 = tpu.matmul %28, %30, %cst_10 {dimension_numbers = #tpu.dot_dimension_numbers<[2], [2], [1], [1], [0, 0, 0, 1, 1, 1], [0], [0]>} : vector<1x16x8xbf16>, vector<1x16x8xbf16>, vector<1x16x16xf32> -> vector<1x16x16xf32>
    "tpu.trace_stop"() : () -> ()
    %cst_11 = arith.constant dense<0xFF800000> : vector<1x16xf32>
    %34 = vector.multi_reduction <maximumf>, %33, %cst_11 [2] : vector<1x16x16xf32> to vector<1x16xf32>
    %35 = vector.shape_cast %34 : vector<1x16xf32> to vector<1x16x1xf32>
    %36 = vector.broadcast %35 : vector<1x16x1xf32> to vector<1x16x16xf32>
    %37 = arith.subf %33, %36 : vector<1x16x16xf32>
    %38 = math.exp %37 : vector<1x16x16xf32>
    %cst_12 = arith.constant dense<0.000000e+00> : vector<1x16xf32>
    %39 = vector.multi_reduction <add>, %38, %cst_12 [2] : vector<1x16x16xf32> to vector<1x16xf32>
    %40 = vector.shape_cast %39 : vector<1x16xf32> to vector<1x16x1xf32>
    %41 = tpu.reciprocal %40 {approx = true} : vector<1x16x1xf32> -> vector<1x16x1xf32>
    %42 = vector.broadcast %41 : vector<1x16x1xf32> to vector<1x16x16xf32>
    %43 = arith.mulf %38, %42 : vector<1x16x16xf32>
    %44 = arith.truncf %43 : vector<1x16x16xf32> to vector<1x16x16xbf16>
    "tpu.trace_start"() <{level = 10 : i32, message = "bnm,bmd->bnd"}> : () -> ()
    %cst_13 = arith.constant dense<0.000000e+00> : vector<1x16x8xf32>
    %45 = tpu.matmul %44, %32, %cst_13 {dimension_numbers = #tpu.dot_dimension_numbers<[2], [1], [1], [2], [0, 0, 0, 1, 1, 2], [0], [0]>} : vector<1x16x16xbf16>, vector<1x16x8xbf16>, vector<1x16x8xf32> -> vector<1x16x8xf32>
    "tpu.trace_stop"() : () -> ()
    %46 = vector.shape_cast %45 : vector<1x16x8xf32> to vector<16x8xf32>
    %47 = arith.truncf %46 : vector<16x8xf32> to vector<16x8xbf16>
    %c0_14 = arith.constant 0 : index
    %c8 = arith.constant 8 : index
    %48 = vector.load %arg6[%c0_14, %c8] : memref<16x32xbf16, #tpu.memory_space<vmem>>, vector<16x8xbf16>
    tpu.vector_store %arg6[%c0_14, %c8], %47 {strides = array<i32>} : memref<16x32xbf16, #tpu.memory_space<vmem>>, vector<16x8xbf16>,
    %49 = vector.extract_strided_slice %4 {offsets = [0, 16], sizes = [16, 8], strides = [1, 1]} : vector<16x96xbf16> to vector<16x8xbf16>
    %50 = vector.shape_cast %49 : vector<16x8xbf16> to vector<1x16x8xbf16>
    %51 = vector.extract_strided_slice %4 {offsets = [0, 48], sizes = [16, 8], strides = [1, 1]} : vector<16x96xbf16> to vector<16x8xbf16>
    %52 = vector.shape_cast %51 : vector<16x8xbf16> to vector<1x16x8xbf16>
    %53 = vector.extract_strided_slice %4 {offsets = [0, 80], sizes = [16, 8], strides = [1, 1]} : vector<16x96xbf16> to vector<16x8xbf16>
    %54 = vector.shape_cast %53 : vector<16x8xbf16> to vector<1x16x8xbf16>
    "tpu.trace_start"() <{level = 10 : i32, message = "bnd,bmd->bnm"}> : () -> ()
    %cst_15 = arith.constant dense<0.000000e+00> : vector<1x16x16xf32>
    %55 = tpu.matmul %50, %52, %cst_15 {dimension_numbers = #tpu.dot_dimension_numbers<[2], [2], [1], [1], [0, 0, 0, 1, 1, 1], [0], [0]>} : vector<1x16x8xbf16>, vector<1x16x8xbf16>, vector<1x16x16xf32> -> vector<1x16x16xf32>
    "tpu.trace_stop"() : () -> ()
    %cst_16 = arith.constant dense<0xFF800000> : vector<1x16xf32>
    %56 = vector.multi_reduction <maximumf>, %55, %cst_16 [2] : vector<1x16x16xf32> to vector<1x16xf32>
    %57 = vector.shape_cast %56 : vector<1x16xf32> to vector<1x16x1xf32>
    %58 = vector.broadcast %57 : vector<1x16x1xf32> to vector<1x16x16xf32>
    %59 = arith.subf %55, %58 : vector<1x16x16xf32>
    %60 = math.exp %59 : vector<1x16x16xf32>
    %cst_17 = arith.constant dense<0.000000e+00> : vector<1x16xf32>
    %61 = vector.multi_reduction <add>, %60, %cst_17 [2] : vector<1x16x16xf32> to vector<1x16xf32>
    %62 = vector.shape_cast %61 : vector<1x16xf32> to vector<1x16x1xf32>
    %63 = tpu.reciprocal %62 {approx = true} : vector<1x16x1xf32> -> vector<1x16x1xf32>
    %64 = vector.broadcast %63 : vector<1x16x1xf32> to vector<1x16x16xf32>
    %65 = arith.mulf %60, %64 : vector<1x16x16xf32>
    %66 = arith.truncf %65 : vector<1x16x16xf32> to vector<1x16x16xbf16>
    "tpu.trace_start"() <{level = 10 : i32, message = "bnm,bmd->bnd"}> : () -> ()
    %cst_18 = arith.constant dense<0.000000e+00> : vector<1x16x8xf32>
    %67 = tpu.matmul %66, %54, %cst_18 {dimension_numbers = #tpu.dot_dimension_numbers<[2], [1], [1], [2], [0, 0, 0, 1, 1, 2], [0], [0]>} : vector<1x16x16xbf16>, vector<1x16x8xbf16>, vector<1x16x8xf32> -> vector<1x16x8xf32>
    "tpu.trace_stop"() : () -> ()
    %68 = vector.shape_cast %67 : vector<1x16x8xf32> to vector<16x8xf32>
    %69 = arith.truncf %68 : vector<16x8xf32> to vector<16x8xbf16>
    %c0_19 = arith.constant 0 : index
    %c16 = arith.constant 16 : index
    %70 = vector.load %arg6[%c0_19, %c16] : memref<16x32xbf16, #tpu.memory_space<vmem>>, vector<16x8xbf16>
    tpu.vector_store %arg6[%c0_19, %c16], %69 {strides = array<i32>} : memref<16x32xbf16, #tpu.memory_space<vmem>>, vector<16x8xbf16>,
    %71 = vector.extract_strided_slice %4 {offsets = [0, 24], sizes = [16, 8], strides = [1, 1]} : vector<16x96xbf16> to vector<16x8xbf16>
    %72 = vector.shape_cast %71 : vector<16x8xbf16> to vector<1x16x8xbf16>
    %73 = vector.extract_strided_slice %4 {offsets = [0, 56], sizes = [16, 8], strides = [1, 1]} : vector<16x96xbf16> to vector<16x8xbf16>
    %74 = vector.shape_cast %73 : vector<16x8xbf16> to vector<1x16x8xbf16>
    %75 = vector.extract_strided_slice %4 {offsets = [0, 88], sizes = [16, 8], strides = [1, 1]} : vector<16x96xbf16> to vector<16x8xbf16>
    %76 = vector.shape_cast %75 : vector<16x8xbf16> to vector<1x16x8xbf16>
    "tpu.trace_start"() <{level = 10 : i32, message = "bnd,bmd->bnm"}> : () -> ()
    %cst_20 = arith.constant dense<0.000000e+00> : vector<1x16x16xf32>
    %77 = tpu.matmul %72, %74, %cst_20 {dimension_numbers = #tpu.dot_dimension_numbers<[2], [2], [1], [1], [0, 0, 0, 1, 1, 1], [0], [0]>} : vector<1x16x8xbf16>, vector<1x16x8xbf16>, vector<1x16x16xf32> -> vector<1x16x16xf32>
    "tpu.trace_stop"() : () -> ()
    %cst_21 = arith.constant dense<0xFF800000> : vector<1x16xf32>
    %78 = vector.multi_reduction <maximumf>, %77, %cst_21 [2] : vector<1x16x16xf32> to vector<1x16xf32>
    %79 = vector.shape_cast %78 : vector<1x16xf32> to vector<1x16x1xf32>
    %80 = vector.broadcast %79 : vector<1x16x1xf32> to vector<1x16x16xf32>
    %81 = arith.subf %77, %80 : vector<1x16x16xf32>
    %82 = math.exp %81 : vector<1x16x16xf32>
    %cst_22 = arith.constant dense<0.000000e+00> : vector<1x16xf32>
    %83 = vector.multi_reduction <add>, %82, %cst_22 [2] : vector<1x16x16xf32> to vector<1x16xf32>
    %84 = vector.shape_cast %83 : vector<1x16xf32> to vector<1x16x1xf32>
    %85 = tpu.reciprocal %84 {approx = true} : vector<1x16x1xf32> -> vector<1x16x1xf32>
    %86 = vector.broadcast %85 : vector<1x16x1xf32> to vector<1x16x16xf32>
    %87 = arith.mulf %82, %86 : vector<1x16x16xf32>
    %88 = arith.truncf %87 : vector<1x16x16xf32> to vector<1x16x16xbf16>
    "tpu.trace_start"() <{level = 10 : i32, message = "bnm,bmd->bnd"}> : () -> ()
    %cst_23 = arith.constant dense<0.000000e+00> : vector<1x16x8xf32>
    %89 = tpu.matmul %88, %76, %cst_23 {dimension_numbers = #tpu.dot_dimension_numbers<[2], [1], [1], [2], [0, 0, 0, 1, 1, 2], [0], [0]>} : vector<1x16x16xbf16>, vector<1x16x8xbf16>, vector<1x16x8xf32> -> vector<1x16x8xf32>
    "tpu.trace_stop"() : () -> ()
    %90 = vector.shape_cast %89 : vector<1x16x8xf32> to vector<16x8xf32>
    %91 = arith.truncf %90 : vector<16x8xf32> to vector<16x8xbf16>
    %c0_24 = arith.constant 0 : index
    %c24 = arith.constant 24 : index
    %92 = vector.load %arg6[%c0_24, %c24] : memref<16x32xbf16, #tpu.memory_space<vmem>>, vector<16x8xbf16>
    tpu.vector_store %arg6[%c0_24, %c24], %91 {strides = array<i32>} : memref<16x32xbf16, #tpu.memory_space<vmem>>, vector<16x8xbf16>,
    %c0_25 = arith.constant 0 : index
    %c0_26 = arith.constant 0 : index
    %93 = vector.load %arg6[%c0_25, %c0_26] : memref<16x32xbf16, #tpu.memory_space<vmem>>, vector<16x32xbf16>
    %c0_27 = arith.constant 0 : index
    %c0_28 = arith.constant 0 : index
    %94 = vector.load %arg3[%c0_27, %c0_28] : memref<32x32xbf16, #tpu.memory_space<vmem>>, vector<32x32xbf16>
    %cst_29 = arith.constant dense<0.000000e+00> : vector<16x32xf32>
    %95 = tpu.matmul %93, %94, %cst_29 {dimension_numbers = #tpu.dot_dimension_numbers<[1], [0], [0], [1], [0, 0, 1, 1], [], []>} : vector<16x32xbf16>, vector<32x32xbf16>, vector<16x32xf32> -> vector<16x32xf32>
    %c0_30 = arith.constant 0 : index
    %c0_31 = arith.constant 0 : index
    %96 = vector.load %arg4[%c0_30, %c0_31] : memref<1x32xf32, #tpu.memory_space<vmem>>, vector<1x32xf32>
    %97 = vector.broadcast %96 : vector<1x32xf32> to vector<16x32xf32>
    %98 = arith.addf %95, %97 : vector<16x32xf32>
    %99 = vector.shape_cast %98 : vector<16x32xf32> to vector<1x16x32xf32>
    %c0_32 = arith.constant 0 : index
    %c0_33 = arith.constant 0 : index
    %c0_34 = arith.constant 0 : index
    %100 = vector.load %arg5[%c0_32, %c0_33, %c0_34] : memref<1x16x32xf32, #tpu.memory_space<vmem>>, vector<1x16x32xf32>
    tpu.vector_store %arg5[%c0_32, %c0_33, %c0_34], %99 {strides = array<i32>} : memref<1x16x32xf32, #tpu.memory_space<vmem>>, vector<1x16x32xf32>,
    return
  }
  func.func @transform_0(%arg0: i32) -> (i32, i32, i32) {
    %c0_i32 = arith.constant 0 : i32
    %c0_i32_0 = arith.constant 0 : i32
    %c0_i32_1 = arith.constant 0 : i32
    return %arg0, %c0_i32, %c0_i32_0 : i32, i32, i32
  }
  func.func @transform_1(%arg0: i32) -> (i32, i32) {
    %c0_i32 = arith.constant 0 : i32
    %c0_i32_0 = arith.constant 0 : i32
    %c0_i32_1 = arith.constant 0 : i32
    return %c0_i32, %c0_i32_0 : i32, i32
  }
  func.func @transform_2(%arg0: i32) -> (i32, i32) {
    %c0_i32 = arith.constant 0 : i32
    %c0_i32_0 = arith.constant 0 : i32
    %c0_i32_1 = arith.constant 0 : i32
    return %c0_i32, %c0_i32_0 : i32, i32
  }
  func.func @transform_3(%arg0: i32) -> (i32, i32) {
    %c0_i32 = arith.constant 0 : i32
    %c0_i32_0 = arith.constant 0 : i32
    %c0_i32_1 = arith.constant 0 : i32
    return %c0_i32, %c0_i32_0 : i32, i32
  }
  func.func @transform_4(%arg0: i32) -> (i32, i32, i32) {
    %c0_i32 = arith.constant 0 : i32
    %c0_i32_0 = arith.constant 0 : i32
    %c0_i32_1 = arith.constant 0 : i32
    return %arg0, %c0_i32, %c0_i32_0 : i32, i32, i32
  }
}

module attributes {stable_mosaic.version = 11 : i64} {
  func.func @_attention_kernel(%arg0: i32, %arg1: memref<1x16x32xbf16, #tpu.memory_space<vmem>>, %arg2: memref<32x96xbf16, #tpu.memory_space<vmem>>, %arg3: memref<32x32xbf16, #tpu.memory_space<vmem>>, %arg4: memref<1x32xf32, #tpu.memory_space<vmem>>, %arg5: memref<1x16x32xf32, #tpu.memory_space<vmem>>, %arg6: memref<16x32xbf16, #tpu.memory_space<vmem>>) attributes {dimension_semantics = [#tpu.dimension_semantics<parallel>], iteration_bounds = array<i64: 2>, scalar_prefetch = 0 : i64, scratch_operands = 1 : i64, tpu.core_type = #tpu.core_type<tc>, window_params = [{transform_indices = @transform_0, window_bounds = array<i64: 1, 16, 32>}, {pipeline_mode = #tpu.pipeline_mode<synchronous>, transform_indices = @transform_1, window_bounds = array<i64: 32, 96>}, {pipeline_mode = #tpu.pipeline_mode<synchronous>, transform_indices = @transform_2, window_bounds = array<i64: 32, 32>}, {pipeline_mode = #tpu.pipeline_mode<synchronous>, transform_indices = @transform_3, window_bounds = array<i64: 1, 32>}, {transform_indices = @transform_4, window_bounds = array<i64: 1, 16, 32>}]} {
    %c0 = arith.constant 0 : index
    %c0_0 = arith.constant 0 : index
    %c0_1 = arith.constant 0 : index
    %0 = vector.load %arg1[%c0, %c0_0, %c0_1] : memref<1x16x32xbf16, #tpu.memory_space<vmem>>, vector<1x16x32xbf16>
    %1 = vector.shape_cast %0 : vector<1x16x32xbf16> to vector<16x32xbf16>
    %c0_2 = arith.constant 0 : index
    %c0_3 = arith.constant 0 : index
    %2 = vector.load %arg2[%c0_2, %c0_3] : memref<32x96xbf16, #tpu.memory_space<vmem>>, vector<32x96xbf16>
    %cst = arith.constant dense<0.000000e+00> : vector<16x96xf32>
    %3 = tpu.matmul %1, %2, %cst {dimension_numbers = #tpu.dot_dimension_numbers<[1], [0], [0], [1], [0, 0, 1, 1], [], []>} : vector<16x32xbf16>, vector<32x96xbf16>, vector<16x96xf32> -> vector<16x96xf32>
    %4 = arith.truncf %3 : vector<16x96xf32> to vector<16x96xbf16>
    %5 = vector.extract_strided_slice %4 {offsets = [0, 0], sizes = [16, 8], strides = [1, 1]} : vector<16x96xbf16> to vector<16x8xbf16>
    %6 = vector.shape_cast %5 : vector<16x8xbf16> to vector<1x16x8xbf16>
    %7 = vector.extract_strided_slice %4 {offsets = [0, 32], sizes = [16, 8], strides = [1, 1]} : vector<16x96xbf16> to vector<16x8xbf16>
    %8 = vector.shape_cast %7 : vector<16x8xbf16> to vector<1x16x8xbf16>
    %9 = vector.extract_strided_slice %4 {offsets = [0, 64], sizes = [16, 8], strides = [1, 1]} : vector<16x96xbf16> to vector<16x8xbf16>
    %10 = vector.shape_cast %9 : vector<16x8xbf16> to vector<1x16x8xbf16>
    "tpu.trace_start"() <{level = 10 : i32, message = "bnd,bmd->bnm"}> : () -> ()
    %cst_4 = arith.constant dense<0.000000e+00> : vector<1x16x16xf32>
    %11 = tpu.matmul %6, %8, %cst_4 {dimension_numbers = #tpu.dot_dimension_numbers<[2], [2], [1], [1], [0, 0, 0, 1, 1, 1], [0], [0]>} : vector<1x16x8xbf16>, vector<1x16x8xbf16>, vector<1x16x16xf32> -> vector<1x16x16xf32>
    "tpu.trace_stop"() : () -> ()
    %cst_5 = arith.constant dense<0xFF800000> : vector<1x16xf32>
    %12 = vector.multi_reduction <maximumf>, %11, %cst_5 [2] : vector<1x16x16xf32> to vector<1x16xf32>
    %13 = vector.shape_cast %12 : vector<1x16xf32> to vector<1x16x1xf32>
    %14 = vector.broadcast %13 : vector<1x16x1xf32> to vector<1x16x16xf32>
    %15 = arith.subf %11, %14 : vector<1x16x16xf32>
    %16 = math.exp %15 : vector<1x16x16xf32>
    %cst_6 = arith.constant dense<0.000000e+00> : vector<1x16xf32>
    %17 = vector.multi_reduction <add>, %16, %cst_6 [2] : vector<1x16x16xf32> to vector<1x16xf32>
    %18 = vector.shape_cast %17 : vector<1x16xf32> to vector<1x16x1xf32>
    %19 = tpu.reciprocal %18 {approx = true} : vector<1x16x1xf32> -> vector<1x16x1xf32>
    %20 = vector.broadcast %19 : vector<1x16x1xf32> to vector<1x16x16xf32>
    %21 = arith.mulf %16, %20 : vector<1x16x16xf32>
    %22 = arith.truncf %21 : vector<1x16x16xf32> to vector<1x16x16xbf16>
    "tpu.trace_start"() <{level = 10 : i32, message = "bnm,bmd->bnd"}> : () -> ()
    %cst_7 = arith.constant dense<0.000000e+00> : vector<1x16x8xf32>
    %23 = tpu.matmul %22, %10, %cst_7 {dimension_numbers = #tpu.dot_dimension_numbers<[2], [1], [1], [2], [0, 0, 0, 1, 1, 2], [0], [0]>} : vector<1x16x16xbf16>, vector<1x16x8xbf16>, vector<1x16x8xf32> -> vector<1x16x8xf32>
    "tpu.trace_stop"() : () -> ()
    %24 = vector.shape_cast %23 : vector<1x16x8xf32> to vector<16x8xf32>
    %25 = arith.truncf %24 : vector<16x8xf32> to vector<16x8xbf16>
    %c0_8 = arith.constant 0 : index
    %c0_9 = arith.constant 0 : index
    %26 = vector.load %arg6[%c0_8, %c0_9] : memref<16x32xbf16, #tpu.memory_space<vmem>>, vector<16x8xbf16>
    tpu.vector_store %arg6[%c0_8, %c0_9], %25 {strides = array<i32>} : memref<16x32xbf16, #tpu.memory_space<vmem>>, vector<16x8xbf16>,
    %27 = vector.extract_strided_slice %4 {offsets = [0, 8], sizes = [16, 8], strides = [1, 1]} : vector<16x96xbf16> to vector<16x8xbf16>
    %28 = vector.shape_cast %27 : vector<16x8xbf16> to vector<1x16x8xbf16>
    %29 = vector.extract_strided_slice %4 {offsets = [0, 40], sizes = [16, 8], strides = [1, 1]} : vector<16x96xbf16> to vector<16x8xbf16>
    %30 = vector.shape_cast %29 : vector<16x8xbf16> to vector<1x16x8xbf16>
    %31 = vector.extract_strided_slice %4 {offsets = [0, 72], sizes = [16, 8], strides = [1, 1]} : vector<16x96xbf16> to vector<16x8xbf16>
    %32 = vector.shape_cast %31 : vector<16x8xbf16> to vector<1x16x8xbf16>
    "tpu.trace_start"() <{level = 10 : i32, message = "bnd,bmd->bnm"}> : () -> ()
    %cst_10 = arith.constant dense<0.000000e+00> : vector<1x16x16xf32>
    %33 = tpu.matmul %28, %30, %cst_10 {dimension_numbers = #tpu.dot_dimension_numbers<[2], [2], [1], [1], [0, 0, 0, 1, 1, 1], [0], [0]>} : vector<1x16x8xbf16>, vector<1x16x8xbf16>, vector<1x16x16xf32> -> vector<1x16x16xf32>
    "tpu.trace_stop"() : () -> ()
    %cst_11 = arith.constant dense<0xFF800000> : vector<1x16xf32>
    %34 = vector.multi_reduction <maximumf>, %33, %cst_11 [2] : vector<1x16x16xf32> to vector<1x16xf32>
    %35 = vector.shape_cast %34 : vector<1x16xf32> to vector<1x16x1xf32>
    %36 = vector.broadcast %35 : vector<1x16x1xf32> to vector<1x16x16xf32>
    %37 = arith.subf %33, %36 : vector<1x16x16xf32>
    %38 = math.exp %37 : vector<1x16x16xf32>
    %cst_12 = arith.constant dense<0.000000e+00> : vector<1x16xf32>
    %39 = vector.multi_reduction <add>, %38, %cst_12 [2] : vector<1x16x16xf32> to vector<1x16xf32>
    %40 = vector.shape_cast %39 : vector<1x16xf32> to vector<1x16x1xf32>
    %41 = tpu.reciprocal %40 {approx = true} : vector<1x16x1xf32> -> vector<1x16x1xf32>
    %42 = vector.broadcast %41 : vector<1x16x1xf32> to vector<1x16x16xf32>
    %43 = arith.mulf %38, %42 : vector<1x16x16xf32>
    %44 = arith.truncf %43 : vector<1x16x16xf32> to vector<1x16x16xbf16>
    "tpu.trace_start"() <{level = 10 : i32, message = "bnm,bmd->bnd"}> : () -> ()
    %cst_13 = arith.constant dense<0.000000e+00> : vector<1x16x8xf32>
    %45 = tpu.matmul %44, %32, %cst_13 {dimension_numbers = #tpu.dot_dimension_numbers<[2], [1], [1], [2], [0, 0, 0, 1, 1, 2], [0], [0]>} : vector<1x16x16xbf16>, vector<1x16x8xbf16>, vector<1x16x8xf32> -> vector<1x16x8xf32>
    "tpu.trace_stop"() : () -> ()
    %46 = vector.shape_cast %45 : vector<1x16x8xf32> to vector<16x8xf32>
    %47 = arith.truncf %46 : vector<16x8xf32> to vector<16x8xbf16>
    %c0_14 = arith.constant 0 : index
    %c8 = arith.constant 8 : index
    %48 = vector.load %arg6[%c0_14, %c8] : memref<16x32xbf16, #tpu.memory_space<vmem>>, vector<16x8xbf16>
    tpu.vector_store %arg6[%c0_14, %c8], %47 {strides = array<i32>} : memref<16x32xbf16, #tpu.memory_space<vmem>>, vector<16x8xbf16>,
    %49 = vector.extract_strided_slice %4 {offsets = [0, 16], sizes = [16, 8], strides = [1, 1]} : vector<16x96xbf16> to vector<16x8xbf16>
    %50 = vector.shape_cast %49 : vector<16x8xbf16> to vector<1x16x8xbf16>
    %51 = vector.extract_strided_slice %4 {offsets = [0, 48], sizes = [16, 8], strides = [1, 1]} : vector<16x96xbf16> to vector<16x8xbf16>
    %52 = vector.shape_cast %51 : vector<16x8xbf16> to vector<1x16x8xbf16>
    %53 = vector.extract_strided_slice %4 {offsets = [0, 80], sizes = [16, 8], strides = [1, 1]} : vector<16x96xbf16> to vector<16x8xbf16>
    %54 = vector.shape_cast %53 : vector<16x8xbf16> to vector<1x16x8xbf16>
    "tpu.trace_start"() <{level = 10 : i32, message = "bnd,bmd->bnm"}> : () -> ()
    %cst_15 = arith.constant dense<0.000000e+00> : vector<1x16x16xf32>
    %55 = tpu.matmul %50, %52, %cst_15 {dimension_numbers = #tpu.dot_dimension_numbers<[2], [2], [1], [1], [0, 0, 0, 1, 1, 1], [0], [0]>} : vector<1x16x8xbf16>, vector<1x16x8xbf16>, vector<1x16x16xf32> -> vector<1x16x16xf32>
    "tpu.trace_stop"() : () -> ()
    %cst_16 = arith.constant dense<0xFF800000> : vector<1x16xf32>
    %56 = vector.multi_reduction <maximumf>, %55, %cst_16 [2] : vector<1x16x16xf32> to vector<1x16xf32>
    %57 = vector.shape_cast %56 : vector<1x16xf32> to vector<1x16x1xf32>
    %58 = vector.broadcast %57 : vector<1x16x1xf32> to vector<1x16x16xf32>
    %59 = arith.subf %55, %58 : vector<1x16x16xf32>
    %60 = math.exp %59 : vector<1x16x16xf32>
    %cst_17 = arith.constant dense<0.000000e+00> : vector<1x16xf32>
    %61 = vector.multi_reduction <add>, %60, %cst_17 [2] : vector<1x16x16xf32> to vector<1x16xf32>
    %62 = vector.shape_cast %61 : vector<1x16xf32> to vector<1x16x1xf32>
    %63 = tpu.reciprocal %62 {approx = true} : vector<1x16x1xf32> -> vector<1x16x1xf32>
    %64 = vector.broadcast %63 : vector<1x16x1xf32> to vector<1x16x16xf32>
    %65 = arith.mulf %60, %64 : vector<1x16x16xf32>
    %66 = arith.truncf %65 : vector<1x16x16xf32> to vector<1x16x16xbf16>
    "tpu.trace_start"() <{level = 10 : i32, message = "bnm,bmd->bnd"}> : () -> ()
    %cst_18 = arith.constant dense<0.000000e+00> : vector<1x16x8xf32>
    %67 = tpu.matmul %66, %54, %cst_18 {dimension_numbers = #tpu.dot_dimension_numbers<[2], [1], [1], [2], [0, 0, 0, 1, 1, 2], [0], [0]>} : vector<1x16x16xbf16>, vector<1x16x8xbf16>, vector<1x16x8xf32> -> vector<1x16x8xf32>
    "tpu.trace_stop"() : () -> ()
    %68 = vector.shape_cast %67 : vector<1x16x8xf32> to vector<16x8xf32>
    %69 = arith.truncf %68 : vector<16x8xf32> to vector<16x8xbf16>
    %c0_19 = arith.constant 0 : index
    %c16 = arith.constant 16 : index
    %70 = vector.load %arg6[%c0_19, %c16] : memref<16x32xbf16, #tpu.memory_space<vmem>>, vector<16x8xbf16>
    tpu.vector_store %arg6[%c0_19, %c16], %69 {strides = array<i32>} : memref<16x32xbf16, #tpu.memory_space<vmem>>, vector<16x8xbf16>,
    %71 = vector.extract_strided_slice %4 {offsets = [0, 24], sizes = [16, 8], strides = [1, 1]} : vector<16x96xbf16> to vector<16x8xbf16>
    %72 = vector.shape_cast %71 : vector<16x8xbf16> to vector<1x16x8xbf16>
    %73 = vector.extract_strided_slice %4 {offsets = [0, 56], sizes = [16, 8], strides = [1, 1]} : vector<16x96xbf16> to vector<16x8xbf16>
    %74 = vector.shape_cast %73 : vector<16x8xbf16> to vector<1x16x8xbf16>
    %75 = vector.extract_strided_slice %4 {offsets = [0, 88], sizes = [16, 8], strides = [1, 1]} : vector<16x96xbf16> to vector<16x8xbf16>
    %76 = vector.shape_cast %75 : vector<16x8xbf16> to vector<1x16x8xbf16>
    "tpu.trace_start"() <{level = 10 : i32, message = "bnd,bmd->bnm"}> : () -> ()
    %cst_20 = arith.constant dense<0.000000e+00> : vector<1x16x16xf32>
    %77 = tpu.matmul %72, %74, %cst_20 {dimension_numbers = #tpu.dot_dimension_numbers<[2], [2], [1], [1], [0, 0, 0, 1, 1, 1], [0], [0]>} : vector<1x16x8xbf16>, vector<1x16x8xbf16>, vector<1x16x16xf32> -> vector<1x16x16xf32>
    "tpu.trace_stop"() : () -> ()
    %cst_21 = arith.constant dense<0xFF800000> : vector<1x16xf32>
    %78 = vector.multi_reduction <maximumf>, %77, %cst_21 [2] : vector<1x16x16xf32> to vector<1x16xf32>
    %79 = vector.shape_cast %78 : vector<1x16xf32> to vector<1x16x1xf32>
    %80 = vector.broadcast %79 : vector<1x16x1xf32> to vector<1x16x16xf32>
    %81 = arith.subf %77, %80 : vector<1x16x16xf32>
    %82 = math.exp %81 : vector<1x16x16xf32>
    %cst_22 = arith.constant dense<0.000000e+00> : vector<1x16xf32>
    %83 = vector.multi_reduction <add>, %82, %cst_22 [2] : vector<1x16x16xf32> to vector<1x16xf32>
    %84 = vector.shape_cast %83 : vector<1x16xf32> to vector<1x16x1xf32>
    %85 = tpu.reciprocal %84 {approx = true} : vector<1x16x1xf32> -> vector<1x16x1xf32>
    %86 = vector.broadcast %85 : vector<1x16x1xf32> to vector<1x16x16xf32>
    %87 = arith.mulf %82, %86 : vector<1x16x16xf32>
    %88 = arith.truncf %87 : vector<1x16x16xf32> to vector<1x16x16xbf16>
    "tpu.trace_start"() <{level = 10 : i32, message = "bnm,bmd->bnd"}> : () -> ()
    %cst_23 = arith.constant dense<0.000000e+00> : vector<1x16x8xf32>
    %89 = tpu.matmul %88, %76, %cst_23 {dimension_numbers = #tpu.dot_dimension_numbers<[2], [1], [1], [2], [0, 0, 0, 1, 1, 2], [0], [0]>} : vector<1x16x16xbf16>, vector<1x16x8xbf16>, vector<1x16x8xf32> -> vector<1x16x8xf32>
    "tpu.trace_stop"() : () -> ()
    %90 = vector.shape_cast %89 : vector<1x16x8xf32> to vector<16x8xf32>
    %91 = arith.truncf %90 : vector<16x8xf32> to vector<16x8xbf16>
    %c0_24 = arith.constant 0 : index
    %c24 = arith.constant 24 : index
    %92 = vector.load %arg6[%c0_24, %c24] : memref<16x32xbf16, #tpu.memory_space<vmem>>, vector<16x8xbf16>
    tpu.vector_store %arg6[%c0_24, %c24], %91 {strides = array<i32>} : memref<16x32xbf16, #tpu.memory_space<vmem>>, vector<16x8xbf16>,
    %c0_25 = arith.constant 0 : index
    %c0_26 = arith.constant 0 : index
    %93 = vector.load %arg6[%c0_25, %c0_26] : memref<16x32xbf16, #tpu.memory_space<vmem>>, vector<16x32xbf16>
    %c0_27 = arith.constant 0 : index
    %c0_28 = arith.constant 0 : index
    %94 = vector.load %arg3[%c0_27, %c0_28] : memref<32x32xbf16, #tpu.memory_space<vmem>>, vector<32x32xbf16>
    %cst_29 = arith.constant dense<0.000000e+00> : vector<16x32xf32>
    %95 = tpu.matmul %93, %94, %cst_29 {dimension_numbers = #tpu.dot_dimension_numbers<[1], [0], [0], [1], [0, 0, 1, 1], [], []>} : vector<16x32xbf16>, vector<32x32xbf16>, vector<16x32xf32> -> vector<16x32xf32>
    %c0_30 = arith.constant 0 : index
    %c0_31 = arith.constant 0 : index
    %96 = vector.load %arg4[%c0_30, %c0_31] : memref<1x32xf32, #tpu.memory_space<vmem>>, vector<1x32xf32>
    %97 = vector.broadcast %96 : vector<1x32xf32> to vector<16x32xf32>
    %98 = arith.addf %95, %97 : vector<16x32xf32>
    %99 = vector.shape_cast %98 : vector<16x32xf32> to vector<1x16x32xf32>
    %c0_32 = arith.constant 0 : index
    %c0_33 = arith.constant 0 : index
    %c0_34 = arith.constant 0 : index
    %100 = vector.load %arg5[%c0_32, %c0_33, %c0_34] : memref<1x16x32xf32, #tpu.memory_space<vmem>>, vector<1x16x32xf32>
    tpu.vector_store %arg5[%c0_32, %c0_33, %c0_34], %99 {strides = array<i32>} : memref<1x16x32xf32, #tpu.memory_space<vmem>>, vector<1x16x32xf32>,
    return
  }
  func.func @transform_0(%arg0: i32) -> (i32, i32, i32) {
    %c0_i32 = arith.constant 0 : i32
    %c0_i32_0 = arith.constant 0 : i32
    %c0_i32_1 = arith.constant 0 : i32
    return %arg0, %c0_i32, %c0_i32_0 : i32, i32, i32
  }
  func.func @transform_1(%arg0: i32) -> (i32, i32) {
    %c0_i32 = arith.constant 0 : i32
    %c0_i32_0 = arith.constant 0 : i32
    %c0_i32_1 = arith.constant 0 : i32
    return %c0_i32, %c0_i32_0 : i32, i32
  }
  func.func @transform_2(%arg0: i32) -> (i32, i32) {
    %c0_i32 = arith.constant 0 : i32
    %c0_i32_0 = arith.constant 0 : i32
    %c0_i32_1 = arith.constant 0 : i32
    return %c0_i32, %c0_i32_0 : i32, i32
  }
  func.func @transform_3(%arg0: i32) -> (i32, i32) {
    %c0_i32 = arith.constant 0 : i32
    %c0_i32_0 = arith.constant 0 : i32
    %c0_i32_1 = arith.constant 0 : i32
    return %c0_i32, %c0_i32_0 : i32, i32
  }
  func.func @transform_4(%arg0: i32) -> (i32, i32, i32) {
    %c0_i32 = arith.constant 0 : i32
    %c0_i32_0 = arith.constant 0 : i32
    %c0_i32_1 = arith.constant 0 : i32
    return %arg0, %c0_i32, %c0_i32_0 : i32, i32, i32
  }
}

</mosaic_0001>

<llo_original>
// kernel: tpu_custom_call.1
$region0: #{tpu_custom_call.1}
  #allocation0 [shape = 'u32[]', space=smem, size = 0x4, offset = 0x4, fixed_abs, tag = 'smem constant byte address 0x4 - core index']
  #allocation1 [shape = 'u32[144,128]{1,0:T(1,128)}', space=vmem, size = 0x12000, scoped, tag = 'internal scratch']
  #allocation2 [shape = 'bf16[16,32]{1,0:T(16,128)(2,1)}', space=vmem, size = 0x1000, scoped, tag = 'scratch operand']
  %s0 = inlined_call_operand.hbm [shape: bf16[2,16,32], index: 0, kind: input, shape index: {}]
  %s1 = inlined_call_operand.hbm [shape: bf16[32,96], index: 1, kind: input, shape index: {}]
  %s2 = inlined_call_operand.hbm [shape: bf16[32,32], index: 2, kind: input, shape index: {}]
  %s3 = inlined_call_operand.vmem [shape: f32[1,32], index: 3, kind: input, shape index: {}]
  %s4 = inlined_call_operand.hbm [shape: f32[2,16,32], index: 4, kind: output, shape index: {}]
  %s5 = sld [smem:[#allocation0]]
  $region61: #{tpu_custom_call.1} parent=0
    _
  %s7 = ssub.s32 1, %s5
  %s8 = scalar_select 0, %s7, %s5
  $region1: #{tpu_custom_call.1} parent=0
    #allocation3 [shape = 'u8[8192]{0}', space=vmem, size = 0x2000, scoped, tag = 'input window, operand 0']
    #allocation4 [shape = 's32[2]{0}', space=sflag, size = 0x8, scoped, tag = 'scoped memory for tpu_custom_call.1']
    #allocation5 [shape = 's32[2]{0}', space=sflag, size = 0x8, scoped, tag = 'scoped memory for tpu_custom_call.1']
    #allocation6 [shape = 'u8[8192]{0}', space=vmem, size = 0x2000, scoped, tag = 'input window, operand 1, single buffered']
    #allocation7 [shape = 's32[1]{0}', space=sflag, size = 0x4, scoped, tag = 'scoped memory for tpu_custom_call.1']
    #allocation8 [shape = 'u8[8192]{0}', space=vmem, size = 0x2000, scoped, tag = 'input window, operand 2, single buffered']
    #allocation9 [shape = 'u8[16384]{0}', space=vmem, size = 0x4000, scoped, tag = 'output window, operand 0']
    %9 = vsyncpa [#allocation4], 0
    %s10 = scalar_lea.sflag [#allocation4], 1
    %11 = vsyncpa %s10, 0
    %12 = vsyncpa [#allocation7], 0
    %13 = vsyncpa [#allocation5], 0
    %s14 = scalar_lea.sflag [#allocation5], 1
    %15 = vsyncpa %s14, 0
    loop: start=0, step=1, limit=4
    $region2: #{tpu_custom_call.1} parent=1 // loop_pre_header
      _
    $region3: #{tpu_custom_call.1} parent=1 // loop_header
      %s17 = sphi 0, %s21
      %p18 = scmp.ge.s32.totalorder %s17, 4
      %s27 = sphi 0, %s29
      %s30 = sphi 0, %s27
      %s31 = sphi 0, %s30
      %s47 = sphi 0, %s31
      %s51 = sphi 0, %s51
      %s53 = sphi 0, %s51
      %s54 = sphi 0, %s53
      %s68 = sphi 0, %s54
      %s72 = sphi 0, %s72
      %s74 = sphi 0, %s72
      %s75 = sphi 0, %s74
      %s89 = sphi 0, %s75
      %s93 = sphi 0, %s93
      %s95 = sphi 0, %s93
      %s96 = sphi 0, %s95
      %s110 = sphi 0, %s96
      %s116 = sphi 0, %s118
      %s119 = sphi 0, %s116
      %s120 = sphi 0, %s119
      %s136 = sphi 0, %s120
    $region4: #{tpu_custom_call.1} parent=1 // loop_header_branch
      %20 = sbr.rel (%p18) target = $region8
    $region5: #{tpu_custom_call.1} parent=1 // loop_body
      %s22 = ssub.s32 %s17, 1
      %s23 = ssub.s32 %s17, 2
      %s24 = sadd.s32 %s17, 1
      %s25 = ssub.s32 %s17, %s24
      %p26 = scmp.eq.s32.totalorder %s25, 0
      %s28 = sadd.s32 %s27, 1
      %s29 = scalar_select %p26, %s27, %s28
      %p32 = pneg %p26
      %p33 = scmp.eq.s32.totalorder %s17, 1
      %p34 = por %p32, %p33
      %p35 = scmp.ne.s32.totalorder %s27, %s30
      %p36 = scmp.eq.s32.totalorder %s17, 0
      %p37 = por %p35, %p36
      %p38 = scmp.ne.s32.totalorder %s27, %s30
      %p39 = scmp.eq.s32.totalorder %s22, 1
      %p40 = por %p38, %p39
      %p41 = scmp.ne.s32.totalorder %s30, %s31
      %p42 = scmp.eq.s32.totalorder %s22, 0
      %p43 = por %p41, %p42
      %p44 = scmp.ne.s32.totalorder %s30, %s31
      %p45 = scmp.eq.s32.totalorder %s23, 1
      %p46 = por %p44, %p45
      %p48 = scmp.ne.s32.totalorder %s31, %s47
      %p49 = scmp.eq.s32.totalorder %s23, 0
      %p50 = por %p48, %p49
      %s52 = sadd.s32 %s51, 1
      %p55 = scmp.eq.s32.totalorder %s17, 1
      %p56 = scmp.ne.s32.totalorder %s51, %s53
      %p57 = scmp.eq.s32.totalorder %s17, 0
      %p58 = por %p56, %p57
      %p59 = scmp.ne.s32.totalorder %s51, %s53
      %p60 = scmp.eq.s32.totalorder %s22, 1
      %p61 = por %p59, %p60
      %p62 = scmp.ne.s32.totalorder %s53, %s54
      %p63 = scmp.eq.s32.totalorder %s22, 0
      %p64 = por %p62, %p63
      %p65 = scmp.ne.s32.totalorder %s53, %s54
      %p66 = scmp.eq.s32.totalorder %s23, 1
      %p67 = por %p65, %p66
      %p69 = scmp.ne.s32.totalorder %s54, %s68
      %p70 = scmp.eq.s32.totalorder %s23, 0
      %p71 = por %p69, %p70
      %s73 = sadd.s32 %s72, 1
      %p76 = scmp.eq.s32.totalorder %s17, 1
      %p77 = scmp.ne.s32.totalorder %s72, %s74
      %p78 = scmp.eq.s32.totalorder %s17, 0
      %p79 = por %p77, %p78
      %p80 = scmp.ne.s32.totalorder %s72, %s74
      %p81 = scmp.eq.s32.totalorder %s22, 1
      %p82 = por %p80, %p81
      %p83 = scmp.ne.s32.totalorder %s74, %s75
      %p84 = scmp.eq.s32.totalorder %s22, 0
      %p85 = por %p83, %p84
      %p86 = scmp.ne.s32.totalorder %s74, %s75
      %p87 = scmp.eq.s32.totalorder %s23, 1
      %p88 = por %p86, %p87
      %p90 = scmp.ne.s32.totalorder %s75, %s89
      %p91 = scmp.eq.s32.totalorder %s23, 0
      %p92 = por %p90, %p91
      %s94 = sadd.s32 %s93, 1
      %p97 = scmp.eq.s32.totalorder %s17, 1
      %p98 = scmp.ne.s32.totalorder %s93, %s95
      %p99 = scmp.eq.s32.totalorder %s17, 0
      %p100 = por %p98, %p99
      %p101 = scmp.ne.s32.totalorder %s93, %s95
      %p102 = scmp.eq.s32.totalorder %s22, 1
      %p103 = por %p101, %p102
      %p104 = scmp.ne.s32.totalorder %s95, %s96
      %p105 = scmp.eq.s32.totalorder %s22, 0
      %p106 = por %p104, %p105
      %p107 = scmp.ne.s32.totalorder %s95, %s96
      %p108 = scmp.eq.s32.totalorder %s23, 1
      %p109 = por %p107, %p108
      %p111 = scmp.ne.s32.totalorder %s96, %s110
      %p112 = scmp.eq.s32.totalorder %s23, 0
      %p113 = por %p111, %p112
      %s114 = ssub.s32 %s17, %s24
      %p115 = scmp.eq.s32.totalorder %s114, 0
      %s117 = sadd.s32 %s116, 1
      %s118 = scalar_select %p115, %s116, %s117
      %p121 = pneg %p115
      %p122 = scmp.eq.s32.totalorder %s17, 1
      %p123 = por %p121, %p122
      %p124 = scmp.ne.s32.totalorder %s116, %s119
      %p125 = scmp.eq.s32.totalorder %s17, 0
      %p126 = por %p124, %p125
      %p127 = scmp.ne.s32.totalorder %s116, %s119
      %p128 = scmp.eq.s32.totalorder %s22, 1
      %p129 = por %p127, %p128
      %p130 = scmp.ne.s32.totalorder %s119, %s120
      %p131 = scmp.eq.s32.totalorder %s22, 0
      %p132 = por %p130, %p131
      %p133 = scmp.ne.s32.totalorder %s119, %s120
      %p134 = scmp.eq.s32.totalorder %s23, 1
      %p135 = por %p133, %p134
      %p137 = scmp.ne.s32.totalorder %s120, %s136
      %p138 = scmp.eq.s32.totalorder %s23, 0
      %p139 = por %p137, %p138
      %p140 = scmp.le.s32.totalorder 1, %s17
      %p141 = scmp.lt.s32.totalorder %s17, 3
      %p142 = pnand %p140, %p141
      %p143 = pneg %p142
      // Predicated region
      $region9: #{tpu_custom_call.1} parent=5 // pred_check
        _
      $region10: #{tpu_custom_call.1} parent=5 // pred_check_branch
        %145 = sbr.rel (%p142) target = $region12
      $region11: #{tpu_custom_call.1} parent=5 // pred_region
        %s146 = ssub.s32 %s17, 1
        // Predicated region
        $region13: #{tpu_custom_call.1} parent=11 // pred_check
          %p147 = pneg %p64
        $region14: #{tpu_custom_call.1} parent=11 // pred_check_branch
          %149 = sbr.rel (%p147) target = $region16
        $region15: #{tpu_custom_call.1} parent=11 // pred_region
          %s151 = ssub.s32 256, 256
          %152 = vsyncadd [#allocation7], %s151
          %s153 = sshll.u32 [#allocation6], 4
          %s154 = int_to_ptr.vmem [resolvable:$true] %s153
          %159 = dma.hbm_to_vmem [thread:$0]  %s1, 256, %s154, [#allocation7], 64, 64, 4
        $region16: #{tpu_custom_call.1} parent=11 // pred_fallthru
          _
        // Predicated region
        $region17: #{tpu_custom_call.1} parent=11 // pred_check
          %p160 = pneg %p85
        $region18: #{tpu_custom_call.1} parent=11 // pred_check_branch
          %162 = sbr.rel (%p160) target = $region20
        $region19: #{tpu_custom_call.1} parent=11 // pred_region
          %s164 = ssub.s32 256, 256
          %165 = vsyncadd [#allocation7], %s164
          %s166 = sshll.u32 [#allocation8], 4
          %s167 = int_to_ptr.vmem [resolvable:$true] %s166
          %172 = dma.hbm_to_vmem [thread:$0]  %s2, 256, %s167, [#allocation7], 64, 64, 4
        $region20: #{tpu_custom_call.1} parent=11 // pred_fallthru
          _
        // Predicated region
        $region21: #{tpu_custom_call.1} parent=11 // pred_check
          %p173 = pneg %p106
        $region22: #{tpu_custom_call.1} parent=11 // pred_check_branch
          %175 = sbr.rel (%p173) target = $region24
        $region23: #{tpu_custom_call.1} parent=11 // pred_region
          _
        $region24: #{tpu_custom_call.1} parent=11 // pred_fallthru
          _
      $region12: #{tpu_custom_call.1} parent=5 // pred_fallthru
        _
      %p176 = scmp.lt.s32.totalorder %s17, 2
      // Predicated region
      $region25: #{tpu_custom_call.1} parent=5 // pred_check
        %p177 = pneg %p176
      $region26: #{tpu_custom_call.1} parent=5 // pred_check_branch
        %179 = sbr.rel (%p177) target = $region28
      $region27: #{tpu_custom_call.1} parent=5 // pred_region
        // Predicated region
        $region29: #{tpu_custom_call.1} parent=27 // pred_check
          %p180 = pneg %p37
        $region30: #{tpu_custom_call.1} parent=27 // pred_check_branch
          %182 = sbr.rel (%p180) target = $region32
        $region31: #{tpu_custom_call.1} parent=27 // pred_region
          %s183 = sand.u32 %s27, 1
          %s184 = scalar_lea.sflag [#allocation4], %s183
          %s185 = sand.u32 %s27, 1
          %s186 = smul.addr %s185, 8
          %s187 = scalar_lea.vmem [#allocation3], %s186
          %s189 = ssub.s32 128, 128
          %190 = vsyncadd %s184, %s189
          %s191 = smul.addr %s17, 2
          %s192 = smul.addr %s191, 64
          %s193 = scalar_lea.hbm %s0, %s192
          %s194 = sshll.u32 %s187, 4
          %s195 = int_to_ptr.vmem [resolvable:$true] %s194
          %200 = dma.hbm_to_vmem [thread:$0]  %s193, 128, %s195, %s184, 64, 64, 4
        $region32: #{tpu_custom_call.1} parent=27 // pred_fallthru
          _
      $region28: #{tpu_custom_call.1} parent=5 // pred_fallthru
        _
      %p201 = scmp.le.s32.totalorder 1, %s17
      %p202 = scmp.lt.s32.totalorder %s17, 3
      %p203 = pnand %p201, %p202
      %p204 = pneg %p203
      // Predicated region
      $region33: #{tpu_custom_call.1} parent=5 // pred_check
        _
      $region34: #{tpu_custom_call.1} parent=5 // pred_check_branch
        %206 = sbr.rel (%p203) target = $region36
      $region35: #{tpu_custom_call.1} parent=5 // pred_region
        %s207 = ssub.s32 %s17, 1
        %s208 = sand.u32 %s30, 1
        %s209 = scalar_lea.sflag [#allocation4], %s208
        %s210 = sand.u32 %s30, 1
        %s211 = smul.addr %s210, 8
        %s212 = scalar_lea.vmem [#allocation3], %s211
        // Predicated region
        $region37: #{tpu_custom_call.1} parent=35 // pred_check
          %p213 = pneg %p43
        $region38: #{tpu_custom_call.1} parent=35 // pred_check_branch
          %215 = sbr.rel (%p213) target = $region40
        $region39: #{tpu_custom_call.1} parent=35 // pred_region
          %216 = dma.done %s209, 128
        $region40: #{tpu_custom_call.1} parent=35 // pred_fallthru
          _
        // Predicated region
        $region41: #{tpu_custom_call.1} parent=35 // pred_check
          %p217 = pneg %p64
        $region42: #{tpu_custom_call.1} parent=35 // pred_check_branch
          %219 = sbr.rel (%p217) target = $region44
        $region43: #{tpu_custom_call.1} parent=35 // pred_region
          %220 = dma.done [#allocation7], 256
        $region44: #{tpu_custom_call.1} parent=35 // pred_fallthru
          _
        // Predicated region
        $region45: #{tpu_custom_call.1} parent=35 // pred_check
          %p221 = pneg %p85
        $region46: #{tpu_custom_call.1} parent=35 // pred_check_branch
          %223 = sbr.rel (%p221) target = $region48
        $region47: #{tpu_custom_call.1} parent=35 // pred_region
          %224 = dma.done [#allocation7], 256
        $region48: #{tpu_custom_call.1} parent=35 // pred_fallthru
          _
        %s225 = sand.u32 %s30, 1
        %s226 = scalar_lea.sflag [#allocation4], %s225
        %s227 = sand.u32 %s30, 1
        %s228 = smul.addr %s227, 8
        %s229 = scalar_lea.vmem [#allocation3], %s228
        %p230 = pneg %p43
        %p231 = pneg %p40
        %p232 = pneg %p64
        %p233 = pneg %p61
        %p234 = pneg %p85
        %p235 = pneg %p82
        %p236 = pneg %p106
        %p237 = pneg %p103
        %p238 = pneg %p132
        %p239 = pneg %p129
        %s240 = sand.u32 %s119, 1
        %s241 = scalar_lea.sflag [#allocation5], %s240
        %s242 = sand.u32 %s119, 1
        %s243 = smul.addr %s242, 16
        %s244 = scalar_lea.vmem [#allocation9], %s243
        %v246 = vld [vmem:[%s212] sm:$0xf]
        %v247 = vld [vmem:[%s212 + $0x4] sm:$0xf]
        %v248 = vld [vmem:[#allocation6] sm:$0xf]
        %v249 = vld [vmem:[#allocation6 + $0x4] sm:$0xf]
        %v250 = vld [vmem:[#allocation6 + $0x8] sm:$0xf]
        %v251 = vld [vmem:[#allocation6 + $0xc] sm:$0xf]
        %v254 = vunpack.c.l.b16 %v246
        %v255 = vunpack.c.l.b16 %v247
        %v256 = vpack.c.b16 %v255, %v254
        %v261 = vunpack.c.l.b16 %v248
        %v262 = vunpack.c.l.b16 %v249
        %v263 = vunpack.c.l.b16 %v250
        %v264 = vunpack.c.l.b16 %v251
        %v265 = vpack.c.b16 %v262, %v261
        %v266 = vpack.c.b16 %v264, %v263
        %vm269 = vcmask 261120
        %v271 = vsel %vm269, %v256, 0
        %273 = vmatprep.subr.bf16.mxu0 0
        %274 = vmatpush1.bf16.msra.mxu0 %v265
        %275 = vmatprep.subr.bf16.mxu0 0
        %276 = vmatpush1.bf16.msra.mxu0 %v266
        %277 = vmatprep.subr.bf16.mxu0 0
        %278 = vmatpush1.bf16.msra.mxu0 0
        %279 = vmatprep.subr.bf16.mxu0 0
        %280 = vmatpush1.bf16.msra.mxu0 0
        %281 = vmatprep.subr.bf16.mxu0 0
        %282 = vmatpush1.bf16.msra.mxu0 0
        %283 = vmatprep.subr.bf16.mxu0 0
        %284 = vmatpush1.bf16.msra.mxu0 0
        %285 = vmatprep.subr.bf16.mxu0 0
        %286 = vmatpush1.bf16.msra.mxu0 0
        %287 = vmatprep.subr.bf16.mxu0 0
        %288 = vmatpush1.bf16.msra.mxu0 0
        %289 = vmatprep.subr.bf16.mxu0 0
        %290 = vmatpush1.bf16.msra.mxu0 0
        %291 = vmatprep.subr.bf16.mxu0 0
        %292 = vmatpush1.bf16.msra.mxu0 0
        %293 = vmatprep.subr.bf16.mxu0 0
        %294 = vmatpush1.bf16.msra.mxu0 0
        %295 = vmatprep.subr.bf16.mxu0 0
        %296 = vmatpush1.bf16.msra.mxu0 0
        %297 = vmatprep.subr.bf16.mxu0 0
        %298 = vmatpush1.bf16.msra.mxu0 0
        %299 = vmatprep.subr.bf16.mxu0 0
        %300 = vmatpush1.bf16.msra.mxu0 0
        %301 = vmatprep.subr.bf16.mxu0 0
        %302 = vmatpush1.bf16.msra.mxu0 0
        %303 = vmatprep.subr.bf16.mxu0 0
        %304 = vmatpush1.bf16.msra.mxu0 0
        %305 = vmatprep.mubr.bf16.mxu0 0
        %306 = vmatmul.mubr.bf16.gmra.mrb[0].mxu0 %v271
        %v307 = vpop.f32.mrb[0].mxu0
        %v308 = vadd.f32 0.0, %v307
        %v309 = vpop.f32.mrb[0].mxu0
        %v310 = vpop.f32.mrb[0].mxu0
        %v311 = vadd.f32 0.0, %v310
        %v312 = vpop.f32.mrb[0].mxu0
        %313 = vdwg.mxu0
        %v314 = vpack.c.bf16 %v311, %v308
        %316 = vrot.lane.b32.xlu0 %v314, 96
        %v317 = vpop.permute.xlu0 %316
        %vm318 = vcmask 64512
        %v320 = vsel %vm318, %v314, 0
        %v323 = vsel %vm318, %v317, 0
        %325 = vmatprep.subr.bf16.mxu0 0
        %326 = vmatpush1.bf16.xpose.msra.mxu0 %v323
        %327 = vmatprep.subr.bf16.mxu0 0
        %328 = vmatpush1.bf16.xpose.msra.mxu0 0
        %329 = vmatprep.subr.bf16.mxu0 0
        %330 = vmatpush1.bf16.xpose.msra.mxu0 0
        %331 = vmatprep.subr.bf16.mxu0 0
        %332 = vmatpush1.bf16.xpose.msra.mxu0 0
        %333 = vmatprep.subr.bf16.mxu0 0
        %334 = vmatpush1.bf16.xpose.msra.mxu0 0
        %335 = vmatprep.subr.bf16.mxu0 0
        %336 = vmatpush1.bf16.xpose.msra.mxu0 0
        %337 = vmatprep.subr.bf16.mxu0 0
        %338 = vmatpush1.bf16.xpose.msra.mxu0 0
        %339 = vmatprep.subr.bf16.mxu0 0
        %340 = vmatpush1.bf16.xpose.msra.mxu0 0
        %341 = vmatprep.subr.bf16.mxu0 0
        %342 = vmatpush1.bf16.xpose.msra.mxu0 0
        %343 = vmatprep.subr.bf16.mxu0 0
        %344 = vmatpush1.bf16.xpose.msra.mxu0 0
        %345 = vmatprep.subr.bf16.mxu0 0
        %346 = vmatpush1.bf16.xpose.msra.mxu0 0
        %347 = vmatprep.subr.bf16.mxu0 0
        %348 = vmatpush1.bf16.xpose.msra.mxu0 0
        %349 = vmatprep.subr.bf16.mxu0 0
        %350 = vmatpush1.bf16.xpose.msra.mxu0 0
        %351 = vmatprep.subr.bf16.mxu0 0
        %352 = vmatpush1.bf16.xpose.msra.mxu0 0
        %353 = vmatprep.subr.bf16.mxu0 0
        %354 = vmatpush1.bf16.xpose.msra.mxu0 0
        %355 = vmatprep.subr.bf16.mxu0 0
        %356 = vmatpush1.bf16.xpose.msra.mxu0 0
        %357 = vmatprep.mubr.bf16.mxu0 0
        %358 = vmatmul.mubr.bf16.gmra.mrb[0].mxu0 %v320
        %v359 = vpop.f32.mrb[0].mxu0
        %v360 = vadd.f32 0.0, %v359
        %v361 = vpop.f32.mrb[0].mxu0
        %v362 = vpop.f32.mrb[0].mxu0
        %v363 = vadd.f32 0.0, %v362
        %v364 = vpop.f32.mrb[0].mxu0
        %365 = vdwg.mxu0
        %vm366 = vcmask 130048
        %v367 = vsel %vm366, %v360, -inf
        %368 = vmax.xlane.f32.xlu0 %v367
        %v369 = vpop.xlane.xlu0 %368
        %v370 = vsel %vm366, %v363, -inf
        %371 = vmax.xlane.f32.xlu0 %v370
        %v372 = vpop.xlane.xlu0 %371
        %v373 = vsub.f32 %v360, %v369
        %v374 = vsub.f32 %v363, %v372
        %v375 = vmul.f32 %v373, 1.442695
        %v376 = vpow.pop %v375
        %v377 = vmul.f32 %v374, 1.442695
        %v378 = vpow.pop %v377
        %v379 = vsel %vm366, %v376, 0.0
        %380 = vadd.xlane.f32.xlu0 %v379
        %v381 = vpop.xlane.xlu0 %380
        %v382 = vsel %vm366, %v378, 0.0
        %383 = vadd.xlane.f32.xlu0 %v382
        %v384 = vpop.xlane.xlu0 %383
        %v385 = vrcp.pop %v381
        %v386 = vrcp.pop %v384
        %v387 = vmul.f32 %v376, %v385
        %v388 = vmul.f32 %v378, %v386
        %v389 = vpack.c.bf16 %v388, %v387
        %390 = vrot.lane.b32.xlu0 %v314, 64
        %v391 = vpop.permute.xlu0 %390
        %v394 = vsel %vm366, %v389, 0
        %396 = vmatprep.subr.bf16.mxu0 0
        %397 = vmatpush1.bf16.msra.mxu0 %v391
        %398 = vmatprep.subr.bf16.mxu0 0
        %399 = vmatpush1.bf16.msra.mxu0 0
        %400 = vmatprep.subr.bf16.mxu0 0
        %401 = vmatpush1.bf16.msra.mxu0 0
        %402 = vmatprep.subr.bf16.mxu0 0
        %403 = vmatpush1.bf16.msra.mxu0 0
        %404 = vmatprep.subr.bf16.mxu0 0
        %405 = vmatpush1.bf16.msra.mxu0 0
        %406 = vmatprep.subr.bf16.mxu0 0
        %407 = vmatpush1.bf16.msra.mxu0 0
        %408 = vmatprep.subr.bf16.mxu0 0
        %409 = vmatpush1.bf16.msra.mxu0 0
        %410 = vmatprep.subr.bf16.mxu0 0
        %411 = vmatpush1.bf16.msra.mxu0 0
        %412 = vmatprep.subr.bf16.mxu0 0
        %413 = vmatpush1.bf16.msra.mxu0 0
        %414 = vmatprep.subr.bf16.mxu0 0
        %415 = vmatpush1.bf16.msra.mxu0 0
        %416 = vmatprep.subr.bf16.mxu0 0
        %417 = vmatpush1.bf16.msra.mxu0 0
        %418 = vmatprep.subr.bf16.mxu0 0
        %419 = vmatpush1.bf16.msra.mxu0 0
        %420 = vmatprep.subr.bf16.mxu0 0
        %421 = vmatpush1.bf16.msra.mxu0 0
        %422 = vmatprep.subr.bf16.mxu0 0
        %423 = vmatpush1.bf16.msra.mxu0 0
        %424 = vmatprep.subr.bf16.mxu0 0
        %425 = vmatpush1.bf16.msra.mxu0 0
        %426 = vmatprep.subr.bf16.mxu0 0
        %427 = vmatpush1.bf16.msra.mxu0 0
        %428 = vmatprep.mubr.bf16.mxu0 0
        %429 = vmatmul.mubr.bf16.gmra.mrb[0].mxu0 %v394
        %v430 = vpop.f32.mrb[0].mxu0
        %v431 = vadd.f32 0.0, %v430
        %v432 = vpop.f32.mrb[0].mxu0
        %v433 = vpop.f32.mrb[0].mxu0
        %v434 = vadd.f32 0.0, %v433
        %v435 = vpop.f32.mrb[0].mxu0
        %436 = vdwg.mxu0
        %v437 = vpack.c.bf16 %v434, %v431
        %438 = vst.msk [vmem:[#allocation2] sm:$0xff] %vm318, %v437
        %439 = vrot.lane.b32.xlu0 %v314, 120
        %v440 = vpop.permute.xlu0 %439
        %441 = vrot.lane.b32.xlu0 %v314, 88
        %v442 = vpop.permute.xlu0 %441
        %v444 = vsel %vm318, %v440, 0
        %v447 = vsel %vm318, %v442, 0
        %449 = vmatprep.subr.bf16.mxu0 0
        %450 = vmatpush1.bf16.xpose.msra.mxu0 %v447
        %451 = vmatprep.subr.bf16.mxu0 0
        %452 = vmatpush1.bf16.xpose.msra.mxu0 0
        %453 = vmatprep.subr.bf16.mxu0 0
        %454 = vmatpush1.bf16.xpose.msra.mxu0 0
        %455 = vmatprep.subr.bf16.mxu0 0
        %456 = vmatpush1.bf16.xpose.msra.mxu0 0
        %457 = vmatprep.subr.bf16.mxu0 0
        %458 = vmatpush1.bf16.xpose.msra.mxu0 0
        %459 = vmatprep.subr.bf16.mxu0 0
        %460 = vmatpush1.bf16.xpose.msra.mxu0 0
        %461 = vmatprep.subr.bf16.mxu0 0
        %462 = vmatpush1.bf16.xpose.msra.mxu0 0
        %463 = vmatprep.subr.bf16.mxu0 0
        %464 = vmatpush1.bf16.xpose.msra.mxu0 0
        %465 = vmatprep.subr.bf16.mxu0 0
        %466 = vmatpush1.bf16.xpose.msra.mxu0 0
        %467 = vmatprep.subr.bf16.mxu0 0
        %468 = vmatpush1.bf16.xpose.msra.mxu0 0
        %469 = vmatprep.subr.bf16.mxu0 0
        %470 = vmatpush1.bf16.xpose.msra.mxu0 0
        %471 = vmatprep.subr.bf16.mxu0 0
        %472 = vmatpush1.bf16.xpose.msra.mxu0 0
        %473 = vmatprep.subr.bf16.mxu0 0
        %474 = vmatpush1.bf16.xpose.msra.mxu0 0
        %475 = vmatprep.subr.bf16.mxu0 0
        %476 = vmatpush1.bf16.xpose.msra.mxu0 0
        %477 = vmatprep.subr.bf16.mxu0 0
        %478 = vmatpush1.bf16.xpose.msra.mxu0 0
        %479 = vmatprep.subr.bf16.mxu0 0
        %480 = vmatpush1.bf16.xpose.msra.mxu0 0
        %481 = vmatprep.mubr.bf16.mxu0 0
        %482 = vmatmul.mubr.bf16.gmra.mrb[0].mxu0 %v444
        %v483 = vpop.f32.mrb[0].mxu0
        %v484 = vadd.f32 0.0, %v483
        %v485 = vpop.f32.mrb[0].mxu0
        %v486 = vpop.f32.mrb[0].mxu0
        %v487 = vadd.f32 0.0, %v486
        %v488 = vpop.f32.mrb[0].mxu0
        %489 = vdwg.mxu0
        %v490 = vsel %vm366, %v484, -inf
        %491 = vmax.xlane.f32.xlu0 %v490
        %v492 = vpop.xlane.xlu0 %491
        %v493 = vsel %vm366, %v487, -inf
        %494 = vmax.xlane.f32.xlu0 %v493
        %v495 = vpop.xlane.xlu0 %494
        %v496 = vsub.f32 %v484, %v492
        %v497 = vsub.f32 %v487, %v495
        %v498 = vmul.f32 %v496, 1.442695
        %v499 = vpow.pop %v498
        %v500 = vmul.f32 %v497, 1.442695
        %v501 = vpow.pop %v500
        %v502 = vsel %vm366, %v499, 0.0
        %503 = vadd.xlane.f32.xlu0 %v502
        %v504 = vpop.xlane.xlu0 %503
        %v505 = vsel %vm366, %v501, 0.0
        %506 = vadd.xlane.f32.xlu0 %v505
        %v507 = vpop.xlane.xlu0 %506
        %v508 = vrcp.pop %v504
        %v509 = vrcp.pop %v507
        %v510 = vmul.f32 %v499, %v508
        %v511 = vmul.f32 %v501, %v509
        %v512 = vpack.c.bf16 %v511, %v510
        %513 = vrot.lane.b32.xlu0 %v314, 56
        %v514 = vpop.permute.xlu0 %513
        %v517 = vsel %vm366, %v512, 0
        %519 = vmatprep.subr.bf16.mxu0 0
        %520 = vmatpush1.bf16.msra.mxu0 %v514
        %521 = vmatprep.subr.bf16.mxu0 0
        %522 = vmatpush1.bf16.msra.mxu0 0
        %523 = vmatprep.subr.bf16.mxu0 0
        %524 = vmatpush1.bf16.msra.mxu0 0
        %525 = vmatprep.subr.bf16.mxu0 0
        %526 = vmatpush1.bf16.msra.mxu0 0
        %527 = vmatprep.subr.bf16.mxu0 0
        %528 = vmatpush1.bf16.msra.mxu0 0
        %529 = vmatprep.subr.bf16.mxu0 0
        %530 = vmatpush1.bf16.msra.mxu0 0
        %531 = vmatprep.subr.bf16.mxu0 0
        %532 = vmatpush1.bf16.msra.mxu0 0
        %533 = vmatprep.subr.bf16.mxu0 0
        %534 = vmatpush1.bf16.msra.mxu0 0
        %535 = vmatprep.subr.bf16.mxu0 0
        %536 = vmatpush1.bf16.msra.mxu0 0
        %537 = vmatprep.subr.bf16.mxu0 0
        %538 = vmatpush1.bf16.msra.mxu0 0
        %539 = vmatprep.subr.bf16.mxu0 0
        %540 = vmatpush1.bf16.msra.mxu0 0
        %541 = vmatprep.subr.bf16.mxu0 0
        %542 = vmatpush1.bf16.msra.mxu0 0
        %543 = vmatprep.subr.bf16.mxu0 0
        %544 = vmatpush1.bf16.msra.mxu0 0
        %545 = vmatprep.subr.bf16.mxu0 0
        %546 = vmatpush1.bf16.msra.mxu0 0
        %547 = vmatprep.subr.bf16.mxu0 0
        %548 = vmatpush1.bf16.msra.mxu0 0
        %549 = vmatprep.subr.bf16.mxu0 0
        %550 = vmatpush1.bf16.msra.mxu0 0
        %551 = vmatprep.mubr.bf16.mxu0 0
        %552 = vmatmul.mubr.bf16.gmra.mrb[0].mxu0 %v517
        %v553 = vpop.f32.mrb[0].mxu0
        %v554 = vadd.f32 0.0, %v553
        %v555 = vpop.f32.mrb[0].mxu0
        %v556 = vpop.f32.mrb[0].mxu0
        %v557 = vadd.f32 0.0, %v556
        %v558 = vpop.f32.mrb[0].mxu0
        %559 = vdwg.mxu0
        %v560 = vpack.c.bf16 %v557, %v554
        %562 = vrot.lane.b32.xlu0 %v560, 8
        %v563 = vpop.permute.xlu0 %562
        %vm565 = vcmask 130112
        %566 = vst.msk [vmem:[#allocation2] sm:$0xff] %vm565, %v563
        %567 = vrot.lane.b32.xlu0 %v314, 112
        %v568 = vpop.permute.xlu0 %567
        %569 = vrot.lane.b32.xlu0 %v314, 80
        %v570 = vpop.permute.xlu0 %569
        %v572 = vsel %vm318, %v568, 0
        %v575 = vsel %vm318, %v570, 0
        %577 = vmatprep.subr.bf16.mxu0 0
        %578 = vmatpush1.bf16.xpose.msra.mxu0 %v575
        %579 = vmatprep.subr.bf16.mxu0 0
        %580 = vmatpush1.bf16.xpose.msra.mxu0 0
        %581 = vmatprep.subr.bf16.mxu0 0
        %582 = vmatpush1.bf16.xpose.msra.mxu0 0
        %583 = vmatprep.subr.bf16.mxu0 0
        %584 = vmatpush1.bf16.xpose.msra.mxu0 0
        %585 = vmatprep.subr.bf16.mxu0 0
        %586 = vmatpush1.bf16.xpose.msra.mxu0 0
        %587 = vmatprep.subr.bf16.mxu0 0
        %588 = vmatpush1.bf16.xpose.msra.mxu0 0
        %589 = vmatprep.subr.bf16.mxu0 0
        %590 = vmatpush1.bf16.xpose.msra.mxu0 0
        %591 = vmatprep.subr.bf16.mxu0 0
        %592 = vmatpush1.bf16.xpose.msra.mxu0 0
        %593 = vmatprep.subr.bf16.mxu0 0
        %594 = vmatpush1.bf16.xpose.msra.mxu0 0
        %595 = vmatprep.subr.bf16.mxu0 0
        %596 = vmatpush1.bf16.xpose.msra.mxu0 0
        %597 = vmatprep.subr.bf16.mxu0 0
        %598 = vmatpush1.bf16.xpose.msra.mxu0 0
        %599 = vmatprep.subr.bf16.mxu0 0
        %600 = vmatpush1.bf16.xpose.msra.mxu0 0
        %601 = vmatprep.subr.bf16.mxu0 0
        %602 = vmatpush1.bf16.xpose.msra.mxu0 0
        %603 = vmatprep.subr.bf16.mxu0 0
        %604 = vmatpush1.bf16.xpose.msra.mxu0 0
        %605 = vmatprep.subr.bf16.mxu0 0
        %606 = vmatpush1.bf16.xpose.msra.mxu0 0
        %607 = vmatprep.subr.bf16.mxu0 0
        %608 = vmatpush1.bf16.xpose.msra.mxu0 0
        %609 = vmatprep.mubr.bf16.mxu0 0
        %610 = vmatmul.mubr.bf16.gmra.mrb[0].mxu0 %v572
        %v611 = vpop.f32.mrb[0].mxu0
        %v612 = vadd.f32 0.0, %v611
        %v613 = vpop.f32.mrb[0].mxu0
        %v614 = vpop.f32.mrb[0].mxu0
        %v615 = vadd.f32 0.0, %v614
        %v616 = vpop.f32.mrb[0].mxu0
        %617 = vdwg.mxu0
        %v618 = vsel %vm366, %v612, -inf
        %619 = vmax.xlane.f32.xlu0 %v618
        %v620 = vpop.xlane.xlu0 %619
        %v621 = vsel %vm366, %v615, -inf
        %622 = vmax.xlane.f32.xlu0 %v621
        %v623 = vpop.xlane.xlu0 %622
        %v624 = vsub.f32 %v612, %v620
        %v625 = vsub.f32 %v615, %v623
        %v626 = vmul.f32 %v624, 1.442695
        %v627 = vpow.pop %v626
        %v628 = vmul.f32 %v625, 1.442695
        %v629 = vpow.pop %v628
        %v630 = vsel %vm366, %v627, 0.0
        %631 = vadd.xlane.f32.xlu0 %v630
        %v632 = vpop.xlane.xlu0 %631
        %v633 = vsel %vm366, %v629, 0.0
        %634 = vadd.xlane.f32.xlu0 %v633
        %v635 = vpop.xlane.xlu0 %634
        %v636 = vrcp.pop %v632
        %v637 = vrcp.pop %v635
        %v638 = vmul.f32 %v627, %v636
        %v639 = vmul.f32 %v629, %v637
        %v640 = vpack.c.bf16 %v639, %v638
        %641 = vrot.lane.b32.xlu0 %v314, 48
        %v642 = vpop.permute.xlu0 %641
        %v645 = vsel %vm366, %v640, 0
        %647 = vmatprep.subr.bf16.mxu0 0
        %648 = vmatpush1.bf16.msra.mxu0 %v642
        %649 = vmatprep.subr.bf16.mxu0 0
        %650 = vmatpush1.bf16.msra.mxu0 0
        %651 = vmatprep.subr.bf16.mxu0 0
        %652 = vmatpush1.bf16.msra.mxu0 0
        %653 = vmatprep.subr.bf16.mxu0 0
        %654 = vmatpush1.bf16.msra.mxu0 0
        %655 = vmatprep.subr.bf16.mxu0 0
        %656 = vmatpush1.bf16.msra.mxu0 0
        %657 = vmatprep.subr.bf16.mxu0 0
        %658 = vmatpush1.bf16.msra.mxu0 0
        %659 = vmatprep.subr.bf16.mxu0 0
        %660 = vmatpush1.bf16.msra.mxu0 0
        %661 = vmatprep.subr.bf16.mxu0 0
        %662 = vmatpush1.bf16.msra.mxu0 0
        %663 = vmatprep.subr.bf16.mxu0 0
        %664 = vmatpush1.bf16.msra.mxu0 0
        %665 = vmatprep.subr.bf16.mxu0 0
        %666 = vmatpush1.bf16.msra.mxu0 0
        %667 = vmatprep.subr.bf16.mxu0 0
        %668 = vmatpush1.bf16.msra.mxu0 0
        %669 = vmatprep.subr.bf16.mxu0 0
        %670 = vmatpush1.bf16.msra.mxu0 0
        %671 = vmatprep.subr.bf16.mxu0 0
        %672 = vmatpush1.bf16.msra.mxu0 0
        %673 = vmatprep.subr.bf16.mxu0 0
        %674 = vmatpush1.bf16.msra.mxu0 0
        %675 = vmatprep.subr.bf16.mxu0 0
        %676 = vmatpush1.bf16.msra.mxu0 0
        %677 = vmatprep.subr.bf16.mxu0 0
        %678 = vmatpush1.bf16.msra.mxu0 0
        %679 = vmatprep.mubr.bf16.mxu0 0
        %680 = vmatmul.mubr.bf16.gmra.mrb[0].mxu0 %v645
        %v681 = vpop.f32.mrb[0].mxu0
        %v682 = vadd.f32 0.0, %v681
        %v683 = vpop.f32.mrb[0].mxu0
        %v684 = vpop.f32.mrb[0].mxu0
        %v685 = vadd.f32 0.0, %v684
        %v686 = vpop.f32.mrb[0].mxu0
        %687 = vdwg.mxu0
        %v688 = vpack.c.bf16 %v685, %v682
        %690 = vrot.lane.b32.xlu0 %v688, 16
        %v691 = vpop.permute.xlu0 %690
        %vm693 = vcmask 195712
        %694 = vst.msk [vmem:[#allocation2] sm:$0xff] %vm693, %v691
        %695 = vrot.lane.b32.xlu0 %v314, 104
        %v696 = vpop.permute.xlu0 %695
        %697 = vrot.lane.b32.xlu0 %v314, 72
        %v698 = vpop.permute.xlu0 %697
        %v700 = vsel %vm318, %v696, 0
        %v703 = vsel %vm318, %v698, 0
        %705 = vmatprep.subr.bf16.mxu0 0
        %706 = vmatpush1.bf16.xpose.msra.mxu0 %v703
        %707 = vmatprep.subr.bf16.mxu0 0
        %708 = vmatpush1.bf16.xpose.msra.mxu0 0
        %709 = vmatprep.subr.bf16.mxu0 0
        %710 = vmatpush1.bf16.xpose.msra.mxu0 0
        %711 = vmatprep.subr.bf16.mxu0 0
        %712 = vmatpush1.bf16.xpose.msra.mxu0 0
        %713 = vmatprep.subr.bf16.mxu0 0
        %714 = vmatpush1.bf16.xpose.msra.mxu0 0
        %715 = vmatprep.subr.bf16.mxu0 0
        %716 = vmatpush1.bf16.xpose.msra.mxu0 0
        %717 = vmatprep.subr.bf16.mxu0 0
        %718 = vmatpush1.bf16.xpose.msra.mxu0 0
        %719 = vmatprep.subr.bf16.mxu0 0
        %720 = vmatpush1.bf16.xpose.msra.mxu0 0
        %721 = vmatprep.subr.bf16.mxu0 0
        %722 = vmatpush1.bf16.xpose.msra.mxu0 0
        %723 = vmatprep.subr.bf16.mxu0 0
        %724 = vmatpush1.bf16.xpose.msra.mxu0 0
        %725 = vmatprep.subr.bf16.mxu0 0
        %726 = vmatpush1.bf16.xpose.msra.mxu0 0
        %727 = vmatprep.subr.bf16.mxu0 0
        %728 = vmatpush1.bf16.xpose.msra.mxu0 0
        %729 = vmatprep.subr.bf16.mxu0 0
        %730 = vmatpush1.bf16.xpose.msra.mxu0 0
        %731 = vmatprep.subr.bf16.mxu0 0
        %732 = vmatpush1.bf16.xpose.msra.mxu0 0
        %733 = vmatprep.subr.bf16.mxu0 0
        %734 = vmatpush1.bf16.xpose.msra.mxu0 0
        %735 = vmatprep.subr.bf16.mxu0 0
        %736 = vmatpush1.bf16.xpose.msra.mxu0 0
        %737 = vmatprep.mubr.bf16.mxu0 0
        %738 = vmatmul.mubr.bf16.gmra.mrb[0].mxu0 %v700
        %v739 = vpop.f32.mrb[0].mxu0
        %v740 = vadd.f32 0.0, %v739
        %v741 = vpop.f32.mrb[0].mxu0
        %v742 = vpop.f32.mrb[0].mxu0
        %v743 = vadd.f32 0.0, %v742
        %v744 = vpop.f32.mrb[0].mxu0
        %745 = vdwg.mxu0
        %v746 = vsel %vm366, %v740, -inf
        %747 = vmax.xlane.f32.xlu0 %v746
        %v748 = vpop.xlane.xlu0 %747
        %v749 = vsel %vm366, %v743, -inf
        %750 = vmax.xlane.f32.xlu0 %v749
        %v751 = vpop.xlane.xlu0 %750
        %v752 = vsub.f32 %v740, %v748
        %v753 = vsub.f32 %v743, %v751
        %v754 = vmul.f32 %v752, 1.442695
        %v755 = vpow.pop %v754
        %v756 = vmul.f32 %v753, 1.442695
        %v757 = vpow.pop %v756
        %v758 = vsel %vm366, %v755, 0.0
        %759 = vadd.xlane.f32.xlu0 %v758
        %v760 = vpop.xlane.xlu0 %759
        %v761 = vsel %vm366, %v757, 0.0
        %762 = vadd.xlane.f32.xlu0 %v761
        %v763 = vpop.xlane.xlu0 %762
        %v764 = vrcp.pop %v760
        %v765 = vrcp.pop %v763
        %v766 = vmul.f32 %v755, %v764
        %v767 = vmul.f32 %v757, %v765
        %v768 = vpack.c.bf16 %v767, %v766
        %769 = vrot.lane.b32.xlu0 %v314, 40
        %v770 = vpop.permute.xlu0 %769
        %v773 = vsel %vm366, %v768, 0
        %775 = vmatprep.subr.bf16.mxu0 0
        %776 = vmatpush1.bf16.msra.mxu0 %v770
        %777 = vmatprep.subr.bf16.mxu0 0
        %778 = vmatpush1.bf16.msra.mxu0 0
        %779 = vmatprep.subr.bf16.mxu0 0
        %780 = vmatpush1.bf16.msra.mxu0 0
        %781 = vmatprep.subr.bf16.mxu0 0
        %782 = vmatpush1.bf16.msra.mxu0 0
        %783 = vmatprep.subr.bf16.mxu0 0
        %784 = vmatpush1.bf16.msra.mxu0 0
        %785 = vmatprep.subr.bf16.mxu0 0
        %786 = vmatpush1.bf16.msra.mxu0 0
        %787 = vmatprep.subr.bf16.mxu0 0
        %788 = vmatpush1.bf16.msra.mxu0 0
        %789 = vmatprep.subr.bf16.mxu0 0
        %790 = vmatpush1.bf16.msra.mxu0 0
        %791 = vmatprep.subr.bf16.mxu0 0
        %792 = vmatpush1.bf16.msra.mxu0 0
        %793 = vmatprep.subr.bf16.mxu0 0
        %794 = vmatpush1.bf16.msra.mxu0 0
        %795 = vmatprep.subr.bf16.mxu0 0
        %796 = vmatpush1.bf16.msra.mxu0 0
        %797 = vmatprep.subr.bf16.mxu0 0
        %798 = vmatpush1.bf16.msra.mxu0 0
        %799 = vmatprep.subr.bf16.mxu0 0
        %800 = vmatpush1.bf16.msra.mxu0 0
        %801 = vmatprep.subr.bf16.mxu0 0
        %802 = vmatpush1.bf16.msra.mxu0 0
        %803 = vmatprep.subr.bf16.mxu0 0
        %804 = vmatpush1.bf16.msra.mxu0 0
        %805 = vmatprep.subr.bf16.mxu0 0
        %806 = vmatpush1.bf16.msra.mxu0 0
        %807 = vmatprep.mubr.bf16.mxu0 0
        %808 = vmatmul.mubr.bf16.gmra.mrb[0].mxu0 %v773
        %v809 = vpop.f32.mrb[0].mxu0
        %v810 = vadd.f32 0.0, %v809
        %v811 = vpop.f32.mrb[0].mxu0
        %v812 = vpop.f32.mrb[0].mxu0
        %v813 = vadd.f32 0.0, %v812
        %v814 = vpop.f32.mrb[0].mxu0
        %815 = vdwg.mxu0
        %v816 = vpack.c.bf16 %v813, %v810
        %818 = vrot.lane.b32.xlu0 %v816, 24
        %v819 = vpop.permute.xlu0 %818
        %vm821 = vcmask 261312
        %822 = vst.msk [vmem:[#allocation2] sm:$0xff] %vm821, %v819
        %v823 = vld [vmem:[#allocation2] sm:$0xff]
        %v824 = vld [vmem:[#allocation8] sm:$0xf]
        %v825 = vld [vmem:[#allocation8 + $0x4] sm:$0xf]
        %v826 = vld [vmem:[#allocation8 + $0x8] sm:$0xf]
        %v827 = vld [vmem:[#allocation8 + $0xc] sm:$0xf]
        %v828 = vld [vmem:[%s3] sm:$0x1]
        %v830 = vlaneseq
        %v831 = vshrl.u32 %v830, 7
        %v832 = vsub.s32 0, %v831
        %v833 = vrot.slane %v828, %v832
        %v839 = vunpack.c.l.b16 %v824
        %v840 = vunpack.c.l.b16 %v825
        %v841 = vunpack.c.l.b16 %v826
        %v842 = vunpack.c.l.b16 %v827
        %v843 = vpack.c.b16 %v840, %v839
        %v844 = vpack.c.b16 %v842, %v841
        %v848 = vsel %vm269, %v823, 0
        %850 = vmatprep.subr.bf16.mxu0 0
        %851 = vmatpush1.bf16.msra.mxu0 %v843
        %852 = vmatprep.subr.bf16.mxu0 0
        %853 = vmatpush1.bf16.msra.mxu0 %v844
        %854 = vmatprep.subr.bf16.mxu0 0
        %855 = vmatpush1.bf16.msra.mxu0 0
        %856 = vmatprep.subr.bf16.mxu0 0
        %857 = vmatpush1.bf16.msra.mxu0 0
        %858 = vmatprep.subr.bf16.mxu0 0
        %859 = vmatpush1.bf16.msra.mxu0 0
        %860 = vmatprep.subr.bf16.mxu0 0
        %861 = vmatpush1.bf16.msra.mxu0 0
        %862 = vmatprep.subr.bf16.mxu0 0
        %863 = vmatpush1.bf16.msra.mxu0 0
        %864 = vmatprep.subr.bf16.mxu0 0
        %865 = vmatpush1.bf16.msra.mxu0 0
        %866 = vmatprep.subr.bf16.mxu0 0
        %867 = vmatpush1.bf16.msra.mxu0 0
        %868 = vmatprep.subr.bf16.mxu0 0
        %869 = vmatpush1.bf16.msra.mxu0 0
        %870 = vmatprep.subr.bf16.mxu0 0
        %871 = vmatpush1.bf16.msra.mxu0 0
        %872 = vmatprep.subr.bf16.mxu0 0
        %873 = vmatpush1.bf16.msra.mxu0 0
        %874 = vmatprep.subr.bf16.mxu0 0
        %875 = vmatpush1.bf16.msra.mxu0 0
        %876 = vmatprep.subr.bf16.mxu0 0
        %877 = vmatpush1.bf16.msra.mxu0 0
        %878 = vmatprep.subr.bf16.mxu0 0
        %879 = vmatpush1.bf16.msra.mxu0 0
        %880 = vmatprep.subr.bf16.mxu0 0
        %881 = vmatpush1.bf16.msra.mxu0 0
        %882 = vmatprep.mubr.bf16.mxu0 0
        %883 = vmatmul.mubr.bf16.gmra.mrb[0].mxu0 %v848
        %v884 = vpop.f32.mrb[0].mxu0
        %v885 = vadd.f32 %v833, %v884
        %v886 = vpop.f32.mrb[0].mxu0
        %v887 = vpop.f32.mrb[0].mxu0
        %v888 = vadd.f32 %v833, %v887
        %v889 = vpop.f32.mrb[0].mxu0
        %890 = vdwg.mxu0
        %891 = vst.msk [vmem:[%s244] sm:$0xff] %vm269, %v885
        %892 = vst.msk [vmem:[%s244 + $0x8] sm:$0xff] %vm269, %v888
        %s893 = sand.u32 %s119, 1
        %s894 = scalar_lea.sflag [#allocation5], %s893
        %s895 = sand.u32 %s119, 1
        %s896 = smul.addr %s895, 16
        %s897 = scalar_lea.vmem [#allocation9], %s896
        // Predicated region
        $region49: #{tpu_custom_call.1} parent=35 // pred_check
          %p898 = pneg %p129
        $region50: #{tpu_custom_call.1} parent=35 // pred_check_branch
          %900 = sbr.rel (%p898) target = $region52
        $region51: #{tpu_custom_call.1} parent=35 // pred_region
          %s902 = ssub.s32 256, 256
          %903 = vsyncadd %s894, %s902
          %s904 = smul.addr %s22, 2
          %s905 = smul.addr %s904, 128
          %s906 = scalar_lea.hbm %s4, %s905
          %s907 = sshll.u32 %s897, 4
          %s908 = int_to_ptr.vmem [resolvable:$true] %s907
          %913 = dma.vmem_to_hbm [thread:$0]  %s908, 256, %s906, %s894, 128, 128, 8
        $region52: #{tpu_custom_call.1} parent=35 // pred_fallthru
          _
      $region36: #{tpu_custom_call.1} parent=5 // pred_fallthru
        _
      %p914 = scmp.le.s32.totalorder 2, %s17
      // Predicated region
      $region53: #{tpu_custom_call.1} parent=5 // pred_check
        %p915 = pneg %p914
      $region54: #{tpu_custom_call.1} parent=5 // pred_check_branch
        %917 = sbr.rel (%p915) target = $region56
      $region55: #{tpu_custom_call.1} parent=5 // pred_region
        %s918 = ssub.s32 %s17, 2
        // Predicated region
        $region57: #{tpu_custom_call.1} parent=55 // pred_check
          %p919 = pneg %p135
        $region58: #{tpu_custom_call.1} parent=55 // pred_check_branch
          %921 = sbr.rel (%p919) target = $region60
        $region59: #{tpu_custom_call.1} parent=55 // pred_region
          %s922 = sand.u32 %s120, 1
          %s923 = scalar_lea.sflag [#allocation5], %s922
          %s924 = sand.u32 %s120, 1
          %s925 = smul.addr %s924, 16
          %s926 = scalar_lea.vmem [#allocation9], %s925
          %927 = dma.done %s923, 256
        $region60: #{tpu_custom_call.1} parent=55 // pred_fallthru
          _
      $region56: #{tpu_custom_call.1} parent=5 // pred_fallthru
        _
    $region6: #{tpu_custom_call.1} parent=1 // loop_footer
      %s21 = sadd.s32 1, %s17
    $region7: #{tpu_custom_call.1} parent=1 // loop_footer_branch
      %16 = sbr.rel target = $region3
    $region8: #{tpu_custom_call.1} parent=1 // loop_exit
      _
    %928 = vsyncpa [#allocation4], 1
    %s929 = scalar_lea.sflag [#allocation4], 1
    %930 = vsyncpa %s929, 1
    %931 = vsyncpa [#allocation7], 1
    %932 = vsyncpa [#allocation5], 1
    %s933 = scalar_lea.sflag [#allocation5], 1
    %934 = vsyncpa %s933, 1

// kernel: tpu_custom_call.1
$region0: #{tpu_custom_call.1}
  #allocation0 [shape = 'u32[]', space=smem, size = 0x4, offset = 0x4, fixed_abs, tag = 'smem constant byte address 0x4 - core index']
  #allocation1 [shape = 'u32[144,128]{1,0:T(1,128)}', space=vmem, size = 0x12000, scoped, tag = 'internal scratch']
  #allocation2 [shape = 'bf16[16,32]{1,0:T(16,128)(2,1)}', space=vmem, size = 0x1000, scoped, tag = 'scratch operand']
  %s0 = inlined_call_operand.hbm [shape: bf16[2,16,32], index: 0, kind: input, shape index: {}]
  %s1 = inlined_call_operand.hbm [shape: bf16[32,96], index: 1, kind: input, shape index: {}]
  %s2 = inlined_call_operand.hbm [shape: bf16[32,32], index: 2, kind: input, shape index: {}]
  %s3 = inlined_call_operand.vmem [shape: f32[1,32], index: 3, kind: input, shape index: {}]
  %s4 = inlined_call_operand.hbm [shape: f32[2,16,32], index: 4, kind: output, shape index: {}]
  %s5 = sld [smem:[#allocation0]]
  $region61: #{tpu_custom_call.1} parent=0
    _
  %s7 = ssub.s32 1, %s5
  %s8 = scalar_select 0, %s7, %s5
  $region1: #{tpu_custom_call.1} parent=0
    #allocation3 [shape = 'u8[8192]{0}', space=vmem, size = 0x2000, scoped, tag = 'input window, operand 0']
    #allocation4 [shape = 's32[2]{0}', space=sflag, size = 0x8, scoped, tag = 'scoped memory for tpu_custom_call.1']
    #allocation5 [shape = 's32[2]{0}', space=sflag, size = 0x8, scoped, tag = 'scoped memory for tpu_custom_call.1']
    #allocation6 [shape = 'u8[8192]{0}', space=vmem, size = 0x2000, scoped, tag = 'input window, operand 1, single buffered']
    #allocation7 [shape = 's32[1]{0}', space=sflag, size = 0x4, scoped, tag = 'scoped memory for tpu_custom_call.1']
    #allocation8 [shape = 'u8[8192]{0}', space=vmem, size = 0x2000, scoped, tag = 'input window, operand 2, single buffered']
    #allocation9 [shape = 'u8[16384]{0}', space=vmem, size = 0x4000, scoped, tag = 'output window, operand 0']
    %9 = vsyncpa [#allocation4], 0
    %s10 = scalar_lea.sflag [#allocation4], 1
    %11 = vsyncpa %s10, 0
    %12 = vsyncpa [#allocation7], 0
    %13 = vsyncpa [#allocation5], 0
    %s14 = scalar_lea.sflag [#allocation5], 1
    %15 = vsyncpa %s14, 0
    loop: start=0, step=1, limit=4
    $region2: #{tpu_custom_call.1} parent=1 // loop_pre_header
      _
    $region3: #{tpu_custom_call.1} parent=1 // loop_header
      %s17 = sphi 0, %s21
      %p18 = scmp.ge.s32.totalorder %s17, 4
      %s27 = sphi 0, %s29
      %s30 = sphi 0, %s27
      %s31 = sphi 0, %s30
      %s47 = sphi 0, %s31
      %s51 = sphi 0, %s51
      %s53 = sphi 0, %s51
      %s54 = sphi 0, %s53
      %s68 = sphi 0, %s54
      %s72 = sphi 0, %s72
      %s74 = sphi 0, %s72
      %s75 = sphi 0, %s74
      %s89 = sphi 0, %s75
      %s93 = sphi 0, %s93
      %s95 = sphi 0, %s93
      %s96 = sphi 0, %s95
      %s110 = sphi 0, %s96
      %s116 = sphi 0, %s118
      %s119 = sphi 0, %s116
      %s120 = sphi 0, %s119
      %s136 = sphi 0, %s120
    $region4: #{tpu_custom_call.1} parent=1 // loop_header_branch
      %20 = sbr.rel (%p18) target = $region8
    $region5: #{tpu_custom_call.1} parent=1 // loop_body
      %s22 = ssub.s32 %s17, 1
      %s23 = ssub.s32 %s17, 2
      %s24 = sadd.s32 %s17, 1
      %s25 = ssub.s32 %s17, %s24
      %p26 = scmp.eq.s32.totalorder %s25, 0
      %s28 = sadd.s32 %s27, 1
      %s29 = scalar_select %p26, %s27, %s28
      %p32 = pneg %p26
      %p33 = scmp.eq.s32.totalorder %s17, 1
      %p34 = por %p32, %p33
      %p35 = scmp.ne.s32.totalorder %s27, %s30
      %p36 = scmp.eq.s32.totalorder %s17, 0
      %p37 = por %p35, %p36
      %p38 = scmp.ne.s32.totalorder %s27, %s30
      %p39 = scmp.eq.s32.totalorder %s22, 1
      %p40 = por %p38, %p39
      %p41 = scmp.ne.s32.totalorder %s30, %s31
      %p42 = scmp.eq.s32.totalorder %s22, 0
      %p43 = por %p41, %p42
      %p44 = scmp.ne.s32.totalorder %s30, %s31
      %p45 = scmp.eq.s32.totalorder %s23, 1
      %p46 = por %p44, %p45
      %p48 = scmp.ne.s32.totalorder %s31, %s47
      %p49 = scmp.eq.s32.totalorder %s23, 0
      %p50 = por %p48, %p49
      %s52 = sadd.s32 %s51, 1
      %p55 = scmp.eq.s32.totalorder %s17, 1
      %p56 = scmp.ne.s32.totalorder %s51, %s53
      %p57 = scmp.eq.s32.totalorder %s17, 0
      %p58 = por %p56, %p57
      %p59 = scmp.ne.s32.totalorder %s51, %s53
      %p60 = scmp.eq.s32.totalorder %s22, 1
      %p61 = por %p59, %p60
      %p62 = scmp.ne.s32.totalorder %s53, %s54
      %p63 = scmp.eq.s32.totalorder %s22, 0
      %p64 = por %p62, %p63
      %p65 = scmp.ne.s32.totalorder %s53, %s54
      %p66 = scmp.eq.s32.totalorder %s23, 1
      %p67 = por %p65, %p66
      %p69 = scmp.ne.s32.totalorder %s54, %s68
      %p70 = scmp.eq.s32.totalorder %s23, 0
      %p71 = por %p69, %p70
      %s73 = sadd.s32 %s72, 1
      %p76 = scmp.eq.s32.totalorder %s17, 1
      %p77 = scmp.ne.s32.totalorder %s72, %s74
      %p78 = scmp.eq.s32.totalorder %s17, 0
      %p79 = por %p77, %p78
      %p80 = scmp.ne.s32.totalorder %s72, %s74
      %p81 = scmp.eq.s32.totalorder %s22, 1
      %p82 = por %p80, %p81
      %p83 = scmp.ne.s32.totalorder %s74, %s75
      %p84 = scmp.eq.s32.totalorder %s22, 0
      %p85 = por %p83, %p84
      %p86 = scmp.ne.s32.totalorder %s74, %s75
      %p87 = scmp.eq.s32.totalorder %s23, 1
      %p88 = por %p86, %p87
      %p90 = scmp.ne.s32.totalorder %s75, %s89
      %p91 = scmp.eq.s32.totalorder %s23, 0
      %p92 = por %p90, %p91
      %s94 = sadd.s32 %s93, 1
      %p97 = scmp.eq.s32.totalorder %s17, 1
      %p98 = scmp.ne.s32.totalorder %s93, %s95
      %p99 = scmp.eq.s32.totalorder %s17, 0
      %p100 = por %p98, %p99
      %p101 = scmp.ne.s32.totalorder %s93, %s95
      %p102 = scmp.eq.s32.totalorder %s22, 1
      %p103 = por %p101, %p102
      %p104 = scmp.ne.s32.totalorder %s95, %s96
      %p105 = scmp.eq.s32.totalorder %s22, 0
      %p106 = por %p104, %p105
      %p107 = scmp.ne.s32.totalorder %s95, %s96
      %p108 = scmp.eq.s32.totalorder %s23, 1
      %p109 = por %p107, %p108
      %p111 = scmp.ne.s32.totalorder %s96, %s110
      %p112 = scmp.eq.s32.totalorder %s23, 0
      %p113 = por %p111, %p112
      %s114 = ssub.s32 %s17, %s24
      %p115 = scmp.eq.s32.totalorder %s114, 0
      %s117 = sadd.s32 %s116, 1
      %s118 = scalar_select %p115, %s116, %s117
      %p121 = pneg %p115
      %p122 = scmp.eq.s32.totalorder %s17, 1
      %p123 = por %p121, %p122
      %p124 = scmp.ne.s32.totalorder %s116, %s119
      %p125 = scmp.eq.s32.totalorder %s17, 0
      %p126 = por %p124, %p125
      %p127 = scmp.ne.s32.totalorder %s116, %s119
      %p128 = scmp.eq.s32.totalorder %s22, 1
      %p129 = por %p127, %p128
      %p130 = scmp.ne.s32.totalorder %s119, %s120
      %p131 = scmp.eq.s32.totalorder %s22, 0
      %p132 = por %p130, %p131
      %p133 = scmp.ne.s32.totalorder %s119, %s120
      %p134 = scmp.eq.s32.totalorder %s23, 1
      %p135 = por %p133, %p134
      %p137 = scmp.ne.s32.totalorder %s120, %s136
      %p138 = scmp.eq.s32.totalorder %s23, 0
      %p139 = por %p137, %p138
      %p140 = scmp.le.s32.totalorder 1, %s17
      %p141 = scmp.lt.s32.totalorder %s17, 3
      %p142 = pnand %p140, %p141
      %p143 = pneg %p142
      // Predicated region
      $region9: #{tpu_custom_call.1} parent=5 // pred_check
        _
      $region10: #{tpu_custom_call.1} parent=5 // pred_check_branch
        %145 = sbr.rel (%p142) target = $region12
      $region11: #{tpu_custom_call.1} parent=5 // pred_region
        %s146 = ssub.s32 %s17, 1
        // Predicated region
        $region13: #{tpu_custom_call.1} parent=11 // pred_check
          %p147 = pneg %p64
        $region14: #{tpu_custom_call.1} parent=11 // pred_check_branch
          %149 = sbr.rel (%p147) target = $region16
        $region15: #{tpu_custom_call.1} parent=11 // pred_region
          %s151 = ssub.s32 256, 256
          %152 = vsyncadd [#allocation7], %s151
          %s153 = sshll.u32 [#allocation6], 4
          %s154 = int_to_ptr.vmem [resolvable:$true] %s153
          %159 = dma.hbm_to_vmem [thread:$0]  %s1, 256, %s154, [#allocation7], 64, 64, 4
        $region16: #{tpu_custom_call.1} parent=11 // pred_fallthru
          _
        // Predicated region
        $region17: #{tpu_custom_call.1} parent=11 // pred_check
          %p160 = pneg %p85
        $region18: #{tpu_custom_call.1} parent=11 // pred_check_branch
          %162 = sbr.rel (%p160) target = $region20
        $region19: #{tpu_custom_call.1} parent=11 // pred_region
          %s164 = ssub.s32 256, 256
          %165 = vsyncadd [#allocation7], %s164
          %s166 = sshll.u32 [#allocation8], 4
          %s167 = int_to_ptr.vmem [resolvable:$true] %s166
          %172 = dma.hbm_to_vmem [thread:$0]  %s2, 256, %s167, [#allocation7], 64, 64, 4
        $region20: #{tpu_custom_call.1} parent=11 // pred_fallthru
          _
        // Predicated region
        $region21: #{tpu_custom_call.1} parent=11 // pred_check
          %p173 = pneg %p106
        $region22: #{tpu_custom_call.1} parent=11 // pred_check_branch
          %175 = sbr.rel (%p173) target = $region24
        $region23: #{tpu_custom_call.1} parent=11 // pred_region
          _
        $region24: #{tpu_custom_call.1} parent=11 // pred_fallthru
          _
      $region12: #{tpu_custom_call.1} parent=5 // pred_fallthru
        _
      %p176 = scmp.lt.s32.totalorder %s17, 2
      // Predicated region
      $region25: #{tpu_custom_call.1} parent=5 // pred_check
        %p177 = pneg %p176
      $region26: #{tpu_custom_call.1} parent=5 // pred_check_branch
        %179 = sbr.rel (%p177) target = $region28
      $region27: #{tpu_custom_call.1} parent=5 // pred_region
        // Predicated region
        $region29: #{tpu_custom_call.1} parent=27 // pred_check
          %p180 = pneg %p37
        $region30: #{tpu_custom_call.1} parent=27 // pred_check_branch
          %182 = sbr.rel (%p180) target = $region32
        $region31: #{tpu_custom_call.1} parent=27 // pred_region
          %s183 = sand.u32 %s27, 1
          %s184 = scalar_lea.sflag [#allocation4], %s183
          %s185 = sand.u32 %s27, 1
          %s186 = smul.addr %s185, 8
          %s187 = scalar_lea.vmem [#allocation3], %s186
          %s189 = ssub.s32 128, 128
          %190 = vsyncadd %s184, %s189
          %s191 = smul.addr %s17, 2
          %s192 = smul.addr %s191, 64
          %s193 = scalar_lea.hbm %s0, %s192
          %s194 = sshll.u32 %s187, 4
          %s195 = int_to_ptr.vmem [resolvable:$true] %s194
          %200 = dma.hbm_to_vmem [thread:$0]  %s193, 128, %s195, %s184, 64, 64, 4
        $region32: #{tpu_custom_call.1} parent=27 // pred_fallthru
          _
      $region28: #{tpu_custom_call.1} parent=5 // pred_fallthru
        _
      %p201 = scmp.le.s32.totalorder 1, %s17
      %p202 = scmp.lt.s32.totalorder %s17, 3
      %p203 = pnand %p201, %p202
      %p204 = pneg %p203
      // Predicated region
      $region33: #{tpu_custom_call.1} parent=5 // pred_check
        _
      $region34: #{tpu_custom_call.1} parent=5 // pred_check_branch
        %206 = sbr.rel (%p203) target = $region36
      $region35: #{tpu_custom_call.1} parent=5 // pred_region
        %s207 = ssub.s32 %s17, 1
        %s208 = sand.u32 %s30, 1
        %s209 = scalar_lea.sflag [#allocation4], %s208
        %s210 = sand.u32 %s30, 1
        %s211 = smul.addr %s210, 8
        %s212 = scalar_lea.vmem [#allocation3], %s211
        // Predicated region
        $region37: #{tpu_custom_call.1} parent=35 // pred_check
          %p213 = pneg %p43
        $region38: #{tpu_custom_call.1} parent=35 // pred_check_branch
          %215 = sbr.rel (%p213) target = $region40
        $region39: #{tpu_custom_call.1} parent=35 // pred_region
          %216 = dma.done %s209, 128
        $region40: #{tpu_custom_call.1} parent=35 // pred_fallthru
          _
        // Predicated region
        $region41: #{tpu_custom_call.1} parent=35 // pred_check
          %p217 = pneg %p64
        $region42: #{tpu_custom_call.1} parent=35 // pred_check_branch
          %219 = sbr.rel (%p217) target = $region44
        $region43: #{tpu_custom_call.1} parent=35 // pred_region
          %220 = dma.done [#allocation7], 256
        $region44: #{tpu_custom_call.1} parent=35 // pred_fallthru
          _
        // Predicated region
        $region45: #{tpu_custom_call.1} parent=35 // pred_check
          %p221 = pneg %p85
        $region46: #{tpu_custom_call.1} parent=35 // pred_check_branch
          %223 = sbr.rel (%p221) target = $region48
        $region47: #{tpu_custom_call.1} parent=35 // pred_region
          %224 = dma.done [#allocation7], 256
        $region48: #{tpu_custom_call.1} parent=35 // pred_fallthru
          _
        %s225 = sand.u32 %s30, 1
        %s226 = scalar_lea.sflag [#allocation4], %s225
        %s227 = sand.u32 %s30, 1
        %s228 = smul.addr %s227, 8
        %s229 = scalar_lea.vmem [#allocation3], %s228
        %p230 = pneg %p43
        %p231 = pneg %p40
        %p232 = pneg %p64
        %p233 = pneg %p61
        %p234 = pneg %p85
        %p235 = pneg %p82
        %p236 = pneg %p106
        %p237 = pneg %p103
        %p238 = pneg %p132
        %p239 = pneg %p129
        %s240 = sand.u32 %s119, 1
        %s241 = scalar_lea.sflag [#allocation5], %s240
        %s242 = sand.u32 %s119, 1
        %s243 = smul.addr %s242, 16
        %s244 = scalar_lea.vmem [#allocation9], %s243
        %v246 = vld [vmem:[%s212] sm:$0xf]
        %v247 = vld [vmem:[%s212 + $0x4] sm:$0xf]
        %v248 = vld [vmem:[#allocation6] sm:$0xf]
        %v249 = vld [vmem:[#allocation6 + $0x4] sm:$0xf]
        %v250 = vld [vmem:[#allocation6 + $0x8] sm:$0xf]
        %v251 = vld [vmem:[#allocation6 + $0xc] sm:$0xf]
        %v254 = vunpack.c.l.b16 %v246
        %v255 = vunpack.c.l.b16 %v247
        %v256 = vpack.c.b16 %v255, %v254
        %v261 = vunpack.c.l.b16 %v248
        %v262 = vunpack.c.l.b16 %v249
        %v263 = vunpack.c.l.b16 %v250
        %v264 = vunpack.c.l.b16 %v251
        %v265 = vpack.c.b16 %v262, %v261
        %v266 = vpack.c.b16 %v264, %v263
        %vm269 = vcmask 261120
        %v271 = vsel %vm269, %v256, 0
        %273 = vmatprep.subr.bf16.mxu0 0
        %274 = vmatpush1.bf16.msra.mxu0 %v265
        %275 = vmatprep.subr.bf16.mxu0 0
        %276 = vmatpush1.bf16.msra.mxu0 %v266
        %277 = vmatprep.subr.bf16.mxu0 0
        %278 = vmatpush1.bf16.msra.mxu0 0
        %279 = vmatprep.subr.bf16.mxu0 0
        %280 = vmatpush1.bf16.msra.mxu0 0
        %281 = vmatprep.subr.bf16.mxu0 0
        %282 = vmatpush1.bf16.msra.mxu0 0
        %283 = vmatprep.subr.bf16.mxu0 0
        %284 = vmatpush1.bf16.msra.mxu0 0
        %285 = vmatprep.subr.bf16.mxu0 0
        %286 = vmatpush1.bf16.msra.mxu0 0
        %287 = vmatprep.subr.bf16.mxu0 0
        %288 = vmatpush1.bf16.msra.mxu0 0
        %289 = vmatprep.subr.bf16.mxu0 0
        %290 = vmatpush1.bf16.msra.mxu0 0
        %291 = vmatprep.subr.bf16.mxu0 0
        %292 = vmatpush1.bf16.msra.mxu0 0
        %293 = vmatprep.subr.bf16.mxu0 0
        %294 = vmatpush1.bf16.msra.mxu0 0
        %295 = vmatprep.subr.bf16.mxu0 0
        %296 = vmatpush1.bf16.msra.mxu0 0
        %297 = vmatprep.subr.bf16.mxu0 0
        %298 = vmatpush1.bf16.msra.mxu0 0
        %299 = vmatprep.subr.bf16.mxu0 0
        %300 = vmatpush1.bf16.msra.mxu0 0
        %301 = vmatprep.subr.bf16.mxu0 0
        %302 = vmatpush1.bf16.msra.mxu0 0
        %303 = vmatprep.subr.bf16.mxu0 0
        %304 = vmatpush1.bf16.msra.mxu0 0
        %305 = vmatprep.mubr.bf16.mxu0 0
        %306 = vmatmul.mubr.bf16.gmra.mrb[0].mxu0 %v271
        %v307 = vpop.f32.mrb[0].mxu0
        %v308 = vadd.f32 0.0, %v307
        %v309 = vpop.f32.mrb[0].mxu0
        %v310 = vpop.f32.mrb[0].mxu0
        %v311 = vadd.f32 0.0, %v310
        %v312 = vpop.f32.mrb[0].mxu0
        %313 = vdwg.mxu0
        %v314 = vpack.c.bf16 %v311, %v308
        %316 = vrot.lane.b32.xlu0 %v314, 96
        %v317 = vpop.permute.xlu0 %316
        %vm318 = vcmask 64512
        %v320 = vsel %vm318, %v314, 0
        %v323 = vsel %vm318, %v317, 0
        %325 = vmatprep.subr.bf16.mxu0 0
        %326 = vmatpush1.bf16.xpose.msra.mxu0 %v323
        %327 = vmatprep.subr.bf16.mxu0 0
        %328 = vmatpush1.bf16.xpose.msra.mxu0 0
        %329 = vmatprep.subr.bf16.mxu0 0
        %330 = vmatpush1.bf16.xpose.msra.mxu0 0
        %331 = vmatprep.subr.bf16.mxu0 0
        %332 = vmatpush1.bf16.xpose.msra.mxu0 0
        %333 = vmatprep.subr.bf16.mxu0 0
        %334 = vmatpush1.bf16.xpose.msra.mxu0 0
        %335 = vmatprep.subr.bf16.mxu0 0
        %336 = vmatpush1.bf16.xpose.msra.mxu0 0
        %337 = vmatprep.subr.bf16.mxu0 0
        %338 = vmatpush1.bf16.xpose.msra.mxu0 0
        %339 = vmatprep.subr.bf16.mxu0 0
        %340 = vmatpush1.bf16.xpose.msra.mxu0 0
        %341 = vmatprep.subr.bf16.mxu0 0
        %342 = vmatpush1.bf16.xpose.msra.mxu0 0
        %343 = vmatprep.subr.bf16.mxu0 0
        %344 = vmatpush1.bf16.xpose.msra.mxu0 0
        %345 = vmatprep.subr.bf16.mxu0 0
        %346 = vmatpush1.bf16.xpose.msra.mxu0 0
        %347 = vmatprep.subr.bf16.mxu0 0
        %348 = vmatpush1.bf16.xpose.msra.mxu0 0
        %349 = vmatprep.subr.bf16.mxu0 0
        %350 = vmatpush1.bf16.xpose.msra.mxu0 0
        %351 = vmatprep.subr.bf16.mxu0 0
        %352 = vmatpush1.bf16.xpose.msra.mxu0 0
        %353 = vmatprep.subr.bf16.mxu0 0
        %354 = vmatpush1.bf16.xpose.msra.mxu0 0
        %355 = vmatprep.subr.bf16.mxu0 0
        %356 = vmatpush1.bf16.xpose.msra.mxu0 0
        %357 = vmatprep.mubr.bf16.mxu0 0
        %358 = vmatmul.mubr.bf16.gmra.mrb[0].mxu0 %v320
        %v359 = vpop.f32.mrb[0].mxu0
        %v360 = vadd.f32 0.0, %v359
        %v361 = vpop.f32.mrb[0].mxu0
        %v362 = vpop.f32.mrb[0].mxu0
        %v363 = vadd.f32 0.0, %v362
        %v364 = vpop.f32.mrb[0].mxu0
        %365 = vdwg.mxu0
        %vm366 = vcmask 130048
        %v367 = vsel %vm366, %v360, -inf
        %368 = vmax.xlane.f32.xlu0 %v367
        %v369 = vpop.xlane.xlu0 %368
        %v370 = vsel %vm366, %v363, -inf
        %371 = vmax.xlane.f32.xlu0 %v370
        %v372 = vpop.xlane.xlu0 %371
        %v373 = vsub.f32 %v360, %v369
        %v374 = vsub.f32 %v363, %v372
        %v375 = vmul.f32 %v373, 1.442695
        %v376 = vpow.pop %v375
        %v377 = vmul.f32 %v374, 1.442695
        %v378 = vpow.pop %v377
        %v379 = vsel %vm366, %v376, 0.0
        %380 = vadd.xlane.f32.xlu0 %v379
        %v381 = vpop.xlane.xlu0 %380
        %v382 = vsel %vm366, %v378, 0.0
        %383 = vadd.xlane.f32.xlu0 %v382
        %v384 = vpop.xlane.xlu0 %383
        %v385 = vrcp.pop %v381
        %v386 = vrcp.pop %v384
        %v387 = vmul.f32 %v376, %v385
        %v388 = vmul.f32 %v378, %v386
        %v389 = vpack.c.bf16 %v388, %v387
        %390 = vrot.lane.b32.xlu0 %v314, 64
        %v391 = vpop.permute.xlu0 %390
        %v394 = vsel %vm366, %v389, 0
        %396 = vmatprep.subr.bf16.mxu0 0
        %397 = vmatpush1.bf16.msra.mxu0 %v391
        %398 = vmatprep.subr.bf16.mxu0 0
        %399 = vmatpush1.bf16.msra.mxu0 0
        %400 = vmatprep.subr.bf16.mxu0 0
        %401 = vmatpush1.bf16.msra.mxu0 0
        %402 = vmatprep.subr.bf16.mxu0 0
        %403 = vmatpush1.bf16.msra.mxu0 0
        %404 = vmatprep.subr.bf16.mxu0 0
        %405 = vmatpush1.bf16.msra.mxu0 0
        %406 = vmatprep.subr.bf16.mxu0 0
        %407 = vmatpush1.bf16.msra.mxu0 0
        %408 = vmatprep.subr.bf16.mxu0 0
        %409 = vmatpush1.bf16.msra.mxu0 0
        %410 = vmatprep.subr.bf16.mxu0 0
        %411 = vmatpush1.bf16.msra.mxu0 0
        %412 = vmatprep.subr.bf16.mxu0 0
        %413 = vmatpush1.bf16.msra.mxu0 0
        %414 = vmatprep.subr.bf16.mxu0 0
        %415 = vmatpush1.bf16.msra.mxu0 0
        %416 = vmatprep.subr.bf16.mxu0 0
        %417 = vmatpush1.bf16.msra.mxu0 0
        %418 = vmatprep.subr.bf16.mxu0 0
        %419 = vmatpush1.bf16.msra.mxu0 0
        %420 = vmatprep.subr.bf16.mxu0 0
        %421 = vmatpush1.bf16.msra.mxu0 0
        %422 = vmatprep.subr.bf16.mxu0 0
        %423 = vmatpush1.bf16.msra.mxu0 0
        %424 = vmatprep.subr.bf16.mxu0 0
        %425 = vmatpush1.bf16.msra.mxu0 0
        %426 = vmatprep.subr.bf16.mxu0 0
        %427 = vmatpush1.bf16.msra.mxu0 0
        %428 = vmatprep.mubr.bf16.mxu0 0
        %429 = vmatmul.mubr.bf16.gmra.mrb[0].mxu0 %v394
        %v430 = vpop.f32.mrb[0].mxu0
        %v431 = vadd.f32 0.0, %v430
        %v432 = vpop.f32.mrb[0].mxu0
        %v433 = vpop.f32.mrb[0].mxu0
        %v434 = vadd.f32 0.0, %v433
        %v435 = vpop.f32.mrb[0].mxu0
        %436 = vdwg.mxu0
        %v437 = vpack.c.bf16 %v434, %v431
        %438 = vst.msk [vmem:[#allocation2] sm:$0xff] %vm318, %v437
        %439 = vrot.lane.b32.xlu0 %v314, 120
        %v440 = vpop.permute.xlu0 %439
        %441 = vrot.lane.b32.xlu0 %v314, 88
        %v442 = vpop.permute.xlu0 %441
        %v444 = vsel %vm318, %v440, 0
        %v447 = vsel %vm318, %v442, 0
        %449 = vmatprep.subr.bf16.mxu0 0
        %450 = vmatpush1.bf16.xpose.msra.mxu0 %v447
        %451 = vmatprep.subr.bf16.mxu0 0
        %452 = vmatpush1.bf16.xpose.msra.mxu0 0
        %453 = vmatprep.subr.bf16.mxu0 0
        %454 = vmatpush1.bf16.xpose.msra.mxu0 0
        %455 = vmatprep.subr.bf16.mxu0 0
        %456 = vmatpush1.bf16.xpose.msra.mxu0 0
        %457 = vmatprep.subr.bf16.mxu0 0
        %458 = vmatpush1.bf16.xpose.msra.mxu0 0
        %459 = vmatprep.subr.bf16.mxu0 0
        %460 = vmatpush1.bf16.xpose.msra.mxu0 0
        %461 = vmatprep.subr.bf16.mxu0 0
        %462 = vmatpush1.bf16.xpose.msra.mxu0 0
        %463 = vmatprep.subr.bf16.mxu0 0
        %464 = vmatpush1.bf16.xpose.msra.mxu0 0
        %465 = vmatprep.subr.bf16.mxu0 0
        %466 = vmatpush1.bf16.xpose.msra.mxu0 0
        %467 = vmatprep.subr.bf16.mxu0 0
        %468 = vmatpush1.bf16.xpose.msra.mxu0 0
        %469 = vmatprep.subr.bf16.mxu0 0
        %470 = vmatpush1.bf16.xpose.msra.mxu0 0
        %471 = vmatprep.subr.bf16.mxu0 0
        %472 = vmatpush1.bf16.xpose.msra.mxu0 0
        %473 = vmatprep.subr.bf16.mxu0 0
        %474 = vmatpush1.bf16.xpose.msra.mxu0 0
        %475 = vmatprep.subr.bf16.mxu0 0
        %476 = vmatpush1.bf16.xpose.msra.mxu0 0
        %477 = vmatprep.subr.bf16.mxu0 0
        %478 = vmatpush1.bf16.xpose.msra.mxu0 0
        %479 = vmatprep.subr.bf16.mxu0 0
        %480 = vmatpush1.bf16.xpose.msra.mxu0 0
        %481 = vmatprep.mubr.bf16.mxu0 0
        %482 = vmatmul.mubr.bf16.gmra.mrb[0].mxu0 %v444
        %v483 = vpop.f32.mrb[0].mxu0
        %v484 = vadd.f32 0.0, %v483
        %v485 = vpop.f32.mrb[0].mxu0
        %v486 = vpop.f32.mrb[0].mxu0
        %v487 = vadd.f32 0.0, %v486
        %v488 = vpop.f32.mrb[0].mxu0
        %489 = vdwg.mxu0
        %v490 = vsel %vm366, %v484, -inf
        %491 = vmax.xlane.f32.xlu0 %v490
        %v492 = vpop.xlane.xlu0 %491
        %v493 = vsel %vm366, %v487, -inf
        %494 = vmax.xlane.f32.xlu0 %v493
        %v495 = vpop.xlane.xlu0 %494
        %v496 = vsub.f32 %v484, %v492
        %v497 = vsub.f32 %v487, %v495
        %v498 = vmul.f32 %v496, 1.442695
        %v499 = vpow.pop %v498
        %v500 = vmul.f32 %v497, 1.442695
        %v501 = vpow.pop %v500
        %v502 = vsel %vm366, %v499, 0.0
        %503 = vadd.xlane.f32.xlu0 %v502
        %v504 = vpop.xlane.xlu0 %503
        %v505 = vsel %vm366, %v501, 0.0
        %506 = vadd.xlane.f32.xlu0 %v505
        %v507 = vpop.xlane.xlu0 %506
        %v508 = vrcp.pop %v504
        %v509 = vrcp.pop %v507
        %v510 = vmul.f32 %v499, %v508
        %v511 = vmul.f32 %v501, %v509
        %v512 = vpack.c.bf16 %v511, %v510
        %513 = vrot.lane.b32.xlu0 %v314, 56
        %v514 = vpop.permute.xlu0 %513
        %v517 = vsel %vm366, %v512, 0
        %519 = vmatprep.subr.bf16.mxu0 0
        %520 = vmatpush1.bf16.msra.mxu0 %v514
        %521 = vmatprep.subr.bf16.mxu0 0
        %522 = vmatpush1.bf16.msra.mxu0 0
        %523 = vmatprep.subr.bf16.mxu0 0
        %524 = vmatpush1.bf16.msra.mxu0 0
        %525 = vmatprep.subr.bf16.mxu0 0
        %526 = vmatpush1.bf16.msra.mxu0 0
        %527 = vmatprep.subr.bf16.mxu0 0
        %528 = vmatpush1.bf16.msra.mxu0 0
        %529 = vmatprep.subr.bf16.mxu0 0
        %530 = vmatpush1.bf16.msra.mxu0 0
        %531 = vmatprep.subr.bf16.mxu0 0
        %532 = vmatpush1.bf16.msra.mxu0 0
        %533 = vmatprep.subr.bf16.mxu0 0
        %534 = vmatpush1.bf16.msra.mxu0 0
        %535 = vmatprep.subr.bf16.mxu0 0
        %536 = vmatpush1.bf16.msra.mxu0 0
        %537 = vmatprep.subr.bf16.mxu0 0
        %538 = vmatpush1.bf16.msra.mxu0 0
        %539 = vmatprep.subr.bf16.mxu0 0
        %540 = vmatpush1.bf16.msra.mxu0 0
        %541 = vmatprep.subr.bf16.mxu0 0
        %542 = vmatpush1.bf16.msra.mxu0 0
        %543 = vmatprep.subr.bf16.mxu0 0
        %544 = vmatpush1.bf16.msra.mxu0 0
        %545 = vmatprep.subr.bf16.mxu0 0
        %546 = vmatpush1.bf16.msra.mxu0 0
        %547 = vmatprep.subr.bf16.mxu0 0
        %548 = vmatpush1.bf16.msra.mxu0 0
        %549 = vmatprep.subr.bf16.mxu0 0
        %550 = vmatpush1.bf16.msra.mxu0 0
        %551 = vmatprep.mubr.bf16.mxu0 0
        %552 = vmatmul.mubr.bf16.gmra.mrb[0].mxu0 %v517
        %v553 = vpop.f32.mrb[0].mxu0
        %v554 = vadd.f32 0.0, %v553
        %v555 = vpop.f32.mrb[0].mxu0
        %v556 = vpop.f32.mrb[0].mxu0
        %v557 = vadd.f32 0.0, %v556
        %v558 = vpop.f32.mrb[0].mxu0
        %559 = vdwg.mxu0
        %v560 = vpack.c.bf16 %v557, %v554
        %562 = vrot.lane.b32.xlu0 %v560, 8
        %v563 = vpop.permute.xlu0 %562
        %vm565 = vcmask 130112
        %566 = vst.msk [vmem:[#allocation2] sm:$0xff] %vm565, %v563
        %567 = vrot.lane.b32.xlu0 %v314, 112
        %v568 = vpop.permute.xlu0 %567
        %569 = vrot.lane.b32.xlu0 %v314, 80
        %v570 = vpop.permute.xlu0 %569
        %v572 = vsel %vm318, %v568, 0
        %v575 = vsel %vm318, %v570, 0
        %577 = vmatprep.subr.bf16.mxu0 0
        %578 = vmatpush1.bf16.xpose.msra.mxu0 %v575
        %579 = vmatprep.subr.bf16.mxu0 0
        %580 = vmatpush1.bf16.xpose.msra.mxu0 0
        %581 = vmatprep.subr.bf16.mxu0 0
        %582 = vmatpush1.bf16.xpose.msra.mxu0 0
        %583 = vmatprep.subr.bf16.mxu0 0
        %584 = vmatpush1.bf16.xpose.msra.mxu0 0
        %585 = vmatprep.subr.bf16.mxu0 0
        %586 = vmatpush1.bf16.xpose.msra.mxu0 0
        %587 = vmatprep.subr.bf16.mxu0 0
        %588 = vmatpush1.bf16.xpose.msra.mxu0 0
        %589 = vmatprep.subr.bf16.mxu0 0
        %590 = vmatpush1.bf16.xpose.msra.mxu0 0
        %591 = vmatprep.subr.bf16.mxu0 0
        %592 = vmatpush1.bf16.xpose.msra.mxu0 0
        %593 = vmatprep.subr.bf16.mxu0 0
        %594 = vmatpush1.bf16.xpose.msra.mxu0 0
        %595 = vmatprep.subr.bf16.mxu0 0
        %596 = vmatpush1.bf16.xpose.msra.mxu0 0
        %597 = vmatprep.subr.bf16.mxu0 0
        %598 = vmatpush1.bf16.xpose.msra.mxu0 0
        %599 = vmatprep.subr.bf16.mxu0 0
        %600 = vmatpush1.bf16.xpose.msra.mxu0 0
        %601 = vmatprep.subr.bf16.mxu0 0
        %602 = vmatpush1.bf16.xpose.msra.mxu0 0
        %603 = vmatprep.subr.bf16.mxu0 0
        %604 = vmatpush1.bf16.xpose.msra.mxu0 0
        %605 = vmatprep.subr.bf16.mxu0 0
        %606 = vmatpush1.bf16.xpose.msra.mxu0 0
        %607 = vmatprep.subr.bf16.mxu0 0
        %608 = vmatpush1.bf16.xpose.msra.mxu0 0
        %609 = vmatprep.mubr.bf16.mxu0 0
        %610 = vmatmul.mubr.bf16.gmra.mrb[0].mxu0 %v572
        %v611 = vpop.f32.mrb[0].mxu0
        %v612 = vadd.f32 0.0, %v611
        %v613 = vpop.f32.mrb[0].mxu0
        %v614 = vpop.f32.mrb[0].mxu0
        %v615 = vadd.f32 0.0, %v614
        %v616 = vpop.f32.mrb[0].mxu0
        %617 = vdwg.mxu0
        %v618 = vsel %vm366, %v612, -inf
        %619 = vmax.xlane.f32.xlu0 %v618
        %v620 = vpop.xlane.xlu0 %619
        %v621 = vsel %vm366, %v615, -inf
        %622 = vmax.xlane.f32.xlu0 %v621
        %v623 = vpop.xlane.xlu0 %622
        %v624 = vsub.f32 %v612, %v620
        %v625 = vsub.f32 %v615, %v623
        %v626 = vmul.f32 %v624, 1.442695
        %v627 = vpow.pop %v626
        %v628 = vmul.f32 %v625, 1.442695
        %v629 = vpow.pop %v628
        %v630 = vsel %vm366, %v627, 0.0
        %631 = vadd.xlane.f32.xlu0 %v630
        %v632 = vpop.xlane.xlu0 %631
        %v633 = vsel %vm366, %v629, 0.0
        %634 = vadd.xlane.f32.xlu0 %v633
        %v635 = vpop.xlane.xlu0 %634
        %v636 = vrcp.pop %v632
        %v637 = vrcp.pop %v635
        %v638 = vmul.f32 %v627, %v636
        %v639 = vmul.f32 %v629, %v637
        %v640 = vpack.c.bf16 %v639, %v638
        %641 = vrot.lane.b32.xlu0 %v314, 48
        %v642 = vpop.permute.xlu0 %641
        %v645 = vsel %vm366, %v640, 0
        %647 = vmatprep.subr.bf16.mxu0 0
        %648 = vmatpush1.bf16.msra.mxu0 %v642
        %649 = vmatprep.subr.bf16.mxu0 0
        %650 = vmatpush1.bf16.msra.mxu0 0
        %651 = vmatprep.subr.bf16.mxu0 0
        %652 = vmatpush1.bf16.msra.mxu0 0
        %653 = vmatprep.subr.bf16.mxu0 0
        %654 = vmatpush1.bf16.msra.mxu0 0
        %655 = vmatprep.subr.bf16.mxu0 0
        %656 = vmatpush1.bf16.msra.mxu0 0
        %657 = vmatprep.subr.bf16.mxu0 0
        %658 = vmatpush1.bf16.msra.mxu0 0
        %659 = vmatprep.subr.bf16.mxu0 0
        %660 = vmatpush1.bf16.msra.mxu0 0
        %661 = vmatprep.subr.bf16.mxu0 0
        %662 = vmatpush1.bf16.msra.mxu0 0
        %663 = vmatprep.subr.bf16.mxu0 0
        %664 = vmatpush1.bf16.msra.mxu0 0
        %665 = vmatprep.subr.bf16.mxu0 0
        %666 = vmatpush1.bf16.msra.mxu0 0
        %667 = vmatprep.subr.bf16.mxu0 0
        %668 = vmatpush1.bf16.msra.mxu0 0
        %669 = vmatprep.subr.bf16.mxu0 0
        %670 = vmatpush1.bf16.msra.mxu0 0
        %671 = vmatprep.subr.bf16.mxu0 0
        %672 = vmatpush1.bf16.msra.mxu0 0
        %673 = vmatprep.subr.bf16.mxu0 0
        %674 = vmatpush1.bf16.msra.mxu0 0
        %675 = vmatprep.subr.bf16.mxu0 0
        %676 = vmatpush1.bf16.msra.mxu0 0
        %677 = vmatprep.subr.bf16.mxu0 0
        %678 = vmatpush1.bf16.msra.mxu0 0
        %679 = vmatprep.mubr.bf16.mxu0 0
        %680 = vmatmul.mubr.bf16.gmra.mrb[0].mxu0 %v645
        %v681 = vpop.f32.mrb[0].mxu0
        %v682 = vadd.f32 0.0, %v681
        %v683 = vpop.f32.mrb[0].mxu0
        %v684 = vpop.f32.mrb[0].mxu0
        %v685 = vadd.f32 0.0, %v684
        %v686 = vpop.f32.mrb[0].mxu0
        %687 = vdwg.mxu0
        %v688 = vpack.c.bf16 %v685, %v682
        %690 = vrot.lane.b32.xlu0 %v688, 16
        %v691 = vpop.permute.xlu0 %690
        %vm693 = vcmask 195712
        %694 = vst.msk [vmem:[#allocation2] sm:$0xff] %vm693, %v691
        %695 = vrot.lane.b32.xlu0 %v314, 104
        %v696 = vpop.permute.xlu0 %695
        %697 = vrot.lane.b32.xlu0 %v314, 72
        %v698 = vpop.permute.xlu0 %697
        %v700 = vsel %vm318, %v696, 0
        %v703 = vsel %vm318, %v698, 0
        %705 = vmatprep.subr.bf16.mxu0 0
        %706 = vmatpush1.bf16.xpose.msra.mxu0 %v703
        %707 = vmatprep.subr.bf16.mxu0 0
        %708 = vmatpush1.bf16.xpose.msra.mxu0 0
        %709 = vmatprep.subr.bf16.mxu0 0
        %710 = vmatpush1.bf16.xpose.msra.mxu0 0
        %711 = vmatprep.subr.bf16.mxu0 0
        %712 = vmatpush1.bf16.xpose.msra.mxu0 0
        %713 = vmatprep.subr.bf16.mxu0 0
        %714 = vmatpush1.bf16.xpose.msra.mxu0 0
        %715 = vmatprep.subr.bf16.mxu0 0
        %716 = vmatpush1.bf16.xpose.msra.mxu0 0
        %717 = vmatprep.subr.bf16.mxu0 0
        %718 = vmatpush1.bf16.xpose.msra.mxu0 0
        %719 = vmatprep.subr.bf16.mxu0 0
        %720 = vmatpush1.bf16.xpose.msra.mxu0 0
        %721 = vmatprep.subr.bf16.mxu0 0
        %722 = vmatpush1.bf16.xpose.msra.mxu0 0
        %723 = vmatprep.subr.bf16.mxu0 0
        %724 = vmatpush1.bf16.xpose.msra.mxu0 0
        %725 = vmatprep.subr.bf16.mxu0 0
        %726 = vmatpush1.bf16.xpose.msra.mxu0 0
        %727 = vmatprep.subr.bf16.mxu0 0
        %728 = vmatpush1.bf16.xpose.msra.mxu0 0
        %729 = vmatprep.subr.bf16.mxu0 0
        %730 = vmatpush1.bf16.xpose.msra.mxu0 0
        %731 = vmatprep.subr.bf16.mxu0 0
        %732 = vmatpush1.bf16.xpose.msra.mxu0 0
        %733 = vmatprep.subr.bf16.mxu0 0
        %734 = vmatpush1.bf16.xpose.msra.mxu0 0
        %735 = vmatprep.subr.bf16.mxu0 0
        %736 = vmatpush1.bf16.xpose.msra.mxu0 0
        %737 = vmatprep.mubr.bf16.mxu0 0
        %738 = vmatmul.mubr.bf16.gmra.mrb[0].mxu0 %v700
        %v739 = vpop.f32.mrb[0].mxu0
        %v740 = vadd.f32 0.0, %v739
        %v741 = vpop.f32.mrb[0].mxu0
        %v742 = vpop.f32.mrb[0].mxu0
        %v743 = vadd.f32 0.0, %v742
        %v744 = vpop.f32.mrb[0].mxu0
        %745 = vdwg.mxu0
        %v746 = vsel %vm366, %v740, -inf
        %747 = vmax.xlane.f32.xlu0 %v746
        %v748 = vpop.xlane.xlu0 %747
        %v749 = vsel %vm366, %v743, -inf
        %750 = vmax.xlane.f32.xlu0 %v749
        %v751 = vpop.xlane.xlu0 %750
        %v752 = vsub.f32 %v740, %v748
        %v753 = vsub.f32 %v743, %v751
        %v754 = vmul.f32 %v752, 1.442695
        %v755 = vpow.pop %v754
        %v756 = vmul.f32 %v753, 1.442695
        %v757 = vpow.pop %v756
        %v758 = vsel %vm366, %v755, 0.0
        %759 = vadd.xlane.f32.xlu0 %v758
        %v760 = vpop.xlane.xlu0 %759
        %v761 = vsel %vm366, %v757, 0.0
        %762 = vadd.xlane.f32.xlu0 %v761
        %v763 = vpop.xlane.xlu0 %762
        %v764 = vrcp.pop %v760
        %v765 = vrcp.pop %v763
        %v766 = vmul.f32 %v755, %v764
        %v767 = vmul.f32 %v757, %v765
        %v768 = vpack.c.bf16 %v767, %v766
        %769 = vrot.lane.b32.xlu0 %v314, 40
        %v770 = vpop.permute.xlu0 %769
        %v773 = vsel %vm366, %v768, 0
        %775 = vmatprep.subr.bf16.mxu0 0
        %776 = vmatpush1.bf16.msra.mxu0 %v770
        %777 = vmatprep.subr.bf16.mxu0 0
        %778 = vmatpush1.bf16.msra.mxu0 0
        %779 = vmatprep.subr.bf16.mxu0 0
        %780 = vmatpush1.bf16.msra.mxu0 0
        %781 = vmatprep.subr.bf16.mxu0 0
        %782 = vmatpush1.bf16.msra.mxu0 0
        %783 = vmatprep.subr.bf16.mxu0 0
        %784 = vmatpush1.bf16.msra.mxu0 0
        %785 = vmatprep.subr.bf16.mxu0 0
        %786 = vmatpush1.bf16.msra.mxu0 0
        %787 = vmatprep.subr.bf16.mxu0 0
        %788 = vmatpush1.bf16.msra.mxu0 0
        %789 = vmatprep.subr.bf16.mxu0 0
        %790 = vmatpush1.bf16.msra.mxu0 0
        %791 = vmatprep.subr.bf16.mxu0 0
        %792 = vmatpush1.bf16.msra.mxu0 0
        %793 = vmatprep.subr.bf16.mxu0 0
        %794 = vmatpush1.bf16.msra.mxu0 0
        %795 = vmatprep.subr.bf16.mxu0 0
        %796 = vmatpush1.bf16.msra.mxu0 0
        %797 = vmatprep.subr.bf16.mxu0 0
        %798 = vmatpush1.bf16.msra.mxu0 0
        %799 = vmatprep.subr.bf16.mxu0 0
        %800 = vmatpush1.bf16.msra.mxu0 0
        %801 = vmatprep.subr.bf16.mxu0 0
        %802 = vmatpush1.bf16.msra.mxu0 0
        %803 = vmatprep.subr.bf16.mxu0 0
        %804 = vmatpush1.bf16.msra.mxu0 0
        %805 = vmatprep.subr.bf16.mxu0 0
        %806 = vmatpush1.bf16.msra.mxu0 0
        %807 = vmatprep.mubr.bf16.mxu0 0
        %808 = vmatmul.mubr.bf16.gmra.mrb[0].mxu0 %v773
        %v809 = vpop.f32.mrb[0].mxu0
        %v810 = vadd.f32 0.0, %v809
        %v811 = vpop.f32.mrb[0].mxu0
        %v812 = vpop.f32.mrb[0].mxu0
        %v813 = vadd.f32 0.0, %v812
        %v814 = vpop.f32.mrb[0].mxu0
        %815 = vdwg.mxu0
        %v816 = vpack.c.bf16 %v813, %v810
        %818 = vrot.lane.b32.xlu0 %v816, 24
        %v819 = vpop.permute.xlu0 %818
        %vm821 = vcmask 261312
        %822 = vst.msk [vmem:[#allocation2] sm:$0xff] %vm821, %v819
        %v823 = vld [vmem:[#allocation2] sm:$0xff]
        %v824 = vld [vmem:[#allocation8] sm:$0xf]
        %v825 = vld [vmem:[#allocation8 + $0x4] sm:$0xf]
        %v826 = vld [vmem:[#allocation8 + $0x8] sm:$0xf]
        %v827 = vld [vmem:[#allocation8 + $0xc] sm:$0xf]
        %v828 = vld [vmem:[%s3] sm:$0x1]
        %v830 = vlaneseq
        %v831 = vshrl.u32 %v830, 7
        %v832 = vsub.s32 0, %v831
        %v833 = vrot.slane %v828, %v832
        %v839 = vunpack.c.l.b16 %v824
        %v840 = vunpack.c.l.b16 %v825
        %v841 = vunpack.c.l.b16 %v826
        %v842 = vunpack.c.l.b16 %v827
        %v843 = vpack.c.b16 %v840, %v839
        %v844 = vpack.c.b16 %v842, %v841
        %v848 = vsel %vm269, %v823, 0
        %850 = vmatprep.subr.bf16.mxu0 0
        %851 = vmatpush1.bf16.msra.mxu0 %v843
        %852 = vmatprep.subr.bf16.mxu0 0
        %853 = vmatpush1.bf16.msra.mxu0 %v844
        %854 = vmatprep.subr.bf16.mxu0 0
        %855 = vmatpush1.bf16.msra.mxu0 0
        %856 = vmatprep.subr.bf16.mxu0 0
        %857 = vmatpush1.bf16.msra.mxu0 0
        %858 = vmatprep.subr.bf16.mxu0 0
        %859 = vmatpush1.bf16.msra.mxu0 0
        %860 = vmatprep.subr.bf16.mxu0 0
        %861 = vmatpush1.bf16.msra.mxu0 0
        %862 = vmatprep.subr.bf16.mxu0 0
        %863 = vmatpush1.bf16.msra.mxu0 0
        %864 = vmatprep.subr.bf16.mxu0 0
        %865 = vmatpush1.bf16.msra.mxu0 0
        %866 = vmatprep.subr.bf16.mxu0 0
        %867 = vmatpush1.bf16.msra.mxu0 0
        %868 = vmatprep.subr.bf16.mxu0 0
        %869 = vmatpush1.bf16.msra.mxu0 0
        %870 = vmatprep.subr.bf16.mxu0 0
        %871 = vmatpush1.bf16.msra.mxu0 0
        %872 = vmatprep.subr.bf16.mxu0 0
        %873 = vmatpush1.bf16.msra.mxu0 0
        %874 = vmatprep.subr.bf16.mxu0 0
        %875 = vmatpush1.bf16.msra.mxu0 0
        %876 = vmatprep.subr.bf16.mxu0 0
        %877 = vmatpush1.bf16.msra.mxu0 0
        %878 = vmatprep.subr.bf16.mxu0 0
        %879 = vmatpush1.bf16.msra.mxu0 0
        %880 = vmatprep.subr.bf16.mxu0 0
        %881 = vmatpush1.bf16.msra.mxu0 0
        %882 = vmatprep.mubr.bf16.mxu0 0
        %883 = vmatmul.mubr.bf16.gmra.mrb[0].mxu0 %v848
        %v884 = vpop.f32.mrb[0].mxu0
        %v885 = vadd.f32 %v833, %v884
        %v886 = vpop.f32.mrb[0].mxu0
        %v887 = vpop.f32.mrb[0].mxu0
        %v888 = vadd.f32 %v833, %v887
        %v889 = vpop.f32.mrb[0].mxu0
        %890 = vdwg.mxu0
        %891 = vst.msk [vmem:[%s244] sm:$0xff] %vm269, %v885
        %892 = vst.msk [vmem:[%s244 + $0x8] sm:$0xff] %vm269, %v888
        %s893 = sand.u32 %s119, 1
        %s894 = scalar_lea.sflag [#allocation5], %s893
        %s895 = sand.u32 %s119, 1
        %s896 = smul.addr %s895, 16
        %s897 = scalar_lea.vmem [#allocation9], %s896
        // Predicated region
        $region49: #{tpu_custom_call.1} parent=35 // pred_check
          %p898 = pneg %p129
        $region50: #{tpu_custom_call.1} parent=35 // pred_check_branch
          %900 = sbr.rel (%p898) target = $region52
        $region51: #{tpu_custom_call.1} parent=35 // pred_region
          %s902 = ssub.s32 256, 256
          %903 = vsyncadd %s894, %s902
          %s904 = smul.addr %s22, 2
          %s905 = smul.addr %s904, 128
          %s906 = scalar_lea.hbm %s4, %s905
          %s907 = sshll.u32 %s897, 4
          %s908 = int_to_ptr.vmem [resolvable:$true] %s907
          %913 = dma.vmem_to_hbm [thread:$0]  %s908, 256, %s906, %s894, 128, 128, 8
        $region52: #{tpu_custom_call.1} parent=35 // pred_fallthru
          _
      $region36: #{tpu_custom_call.1} parent=5 // pred_fallthru
        _
      %p914 = scmp.le.s32.totalorder 2, %s17
      // Predicated region
      $region53: #{tpu_custom_call.1} parent=5 // pred_check
        %p915 = pneg %p914
      $region54: #{tpu_custom_call.1} parent=5 // pred_check_branch
        %917 = sbr.rel (%p915) target = $region56
      $region55: #{tpu_custom_call.1} parent=5 // pred_region
        %s918 = ssub.s32 %s17, 2
        // Predicated region
        $region57: #{tpu_custom_call.1} parent=55 // pred_check
          %p919 = pneg %p135
        $region58: #{tpu_custom_call.1} parent=55 // pred_check_branch
          %921 = sbr.rel (%p919) target = $region60
        $region59: #{tpu_custom_call.1} parent=55 // pred_region
          %s922 = sand.u32 %s120, 1
          %s923 = scalar_lea.sflag [#allocation5], %s922
          %s924 = sand.u32 %s120, 1
          %s925 = smul.addr %s924, 16
          %s926 = scalar_lea.vmem [#allocation9], %s925
          %927 = dma.done %s923, 256
        $region60: #{tpu_custom_call.1} parent=55 // pred_fallthru
          _
      $region56: #{tpu_custom_call.1} parent=5 // pred_fallthru
        _
    $region6: #{tpu_custom_call.1} parent=1 // loop_footer
      %s21 = sadd.s32 1, %s17
    $region7: #{tpu_custom_call.1} parent=1 // loop_footer_branch
      %16 = sbr.rel target = $region3
    $region8: #{tpu_custom_call.1} parent=1 // loop_exit
      _
    %928 = vsyncpa [#allocation4], 1
    %s929 = scalar_lea.sflag [#allocation4], 1
    %930 = vsyncpa %s929, 1
    %931 = vsyncpa [#allocation7], 1
    %932 = vsyncpa [#allocation5], 1
    %s933 = scalar_lea.sflag [#allocation5], 1
    %934 = vsyncpa %s933, 1

</llo_original>
